<compile_context>
chip_gen: v5e
topology: v5e:2x2
jax: 0.10.0
libtpu: 0.0.40
codegen_flags: <defaults>
</compile_context>

<pallas_src>
import jax
import jax.numpy as jnp
from jax.experimental import pallas as pl
from jax.experimental.pallas import tpu as pltpu


def _make_vat_kernel(xi, eps, ip, inv_count, cin, cout, tn, hw, n_valid, n_pad):
    """Builds the per-block VAT kernel with static hyperparameters closed over."""
    need_mask = n_pad != n_valid
    sigmoid = jax.nn.sigmoid

    def kernel(x_ref, d_ref, w_ref, b_ref, out_ref):
        blk = pl.program_id(0)

        # ---- scalar weights / bias from SMEM, hoisted out of every loop ----
        w = [[w_ref[o, c] for c in range(cin)] for o in range(cout)]
        b = [b_ref[o] for o in range(cout)]

        def mix(v, o):
            """(W·v)[o]: one output channel of the 1x1 conv as VPU broadcast-FMAs."""
            acc = v[0] * w[o][0]
            for c in range(1, cin):
                acc = acc + v[c] * w[o][c]
            return acc

        def l2_normalize(v):
            """Per-sample (per-row) L2 normalization over all cin*hw elements."""
            nrm2 = jnp.sum(v[0] * v[0], axis=1, keepdims=True)
            for c in range(1, cin):
                nrm2 = nrm2 + jnp.sum(v[c] * v[c], axis=1, keepdims=True)
            inv = 1.0 / (jnp.sqrt(nrm2) + 1e-8)          # (tn, 1), matches torch
            return [vc * inv for vc in v]

        # ---- base logits z_x = model(x), pred = sigmoid(z_x): computed once ----
        # (channel views are static lane slices of the (tn, cin*hw) block)
        x = [x_ref[:, c * hw:(c + 1) * hw] for c in range(cin)]
        z_x = [mix(x, o) + b[o] for o in range(cout)]
        pred = [sigmoid(z) for z in z_x]
        del x  # linearity: x is never needed again

        # ---- d0 = l2_normalize(rand - 0.5), rand streamed from HBM ----
        d = l2_normalize([d_ref[:, c * hw:(c + 1) * hw] for c in range(cin)])

        # ---- power iteration(s): d <- normalize(W^T (sigmoid(z_x + xi*W·d) - pred))
        # streamed per output channel; xi and 1/M scales dropped (norm cancels them)
        for _ in range(ip):
            g = [None] * cin
            for o in range(cout):
                dz = sigmoid(z_x[o] + xi * mix(d, o)) - pred[o]
                for c in range(cin):
                    t = dz * w[o][c]
                    g[c] = t if g[c] is None else g[c] + t
            d = l2_normalize(g)

        # ---- final LDS: mean BCE-with-logits(model(x + eps*d), pred) ----
        if need_mask:
            row = jax.lax.broadcasted_iota(jnp.int32, (tn, 1), 0) + blk * tn
            rmask = (row < n_valid).astype(jnp.float32)   # zero out padded rows
        loss = jnp.zeros((), jnp.float32)
        for o in range(cout):
            za = z_x[o] + eps * mix(d, o)
            # numerically stable BCE-with-logits: max(z,0) - z*t + log1p(exp(-|z|))
            bce = (jnp.maximum(za, 0.0) - za * pred[o]
                   + jnp.log1p(jnp.exp(-jnp.abs(za))))
            bce_row = jnp.sum(bce, axis=1, keepdims=True)           # (tn, 1)
            if need_mask:
                bce_row = bce_row * rmask
            loss = loss + jnp.sum(bce_row)

        # one (8,128) partial-loss tile per block; the wrapper sums element [0,0]
        out_ref[...] = jnp.full(out_ref.shape, loss * inv_count, jnp.float32)

    return kernel


def _choose_tn(n_pad, sample_bytes, budget_bytes=1 << 20):
    """Batch tile: largest power-of-two multiple of 8 dividing n_pad within the byte
    budget, capped so there are >=2 blocks (both v7x TensorCores) and, when the batch
    allows, >=4 blocks (so the pipeline overlaps the next block's DMA with compute)."""
    assert n_pad % 8 == 0
    if n_pad >= 32:
        cap = n_pad // 4
    elif n_pad >= 16:
        cap = n_pad // 2
    else:
        cap = n_pad
    tn = 8
    while (tn * 2 <= cap and n_pad % (tn * 2) == 0
           and (tn * 2) * sample_bytes <= budget_bytes):
        tn *= 2
    return tn


def vat_loss_pallas(x_nchw, w, b, *, xi=10.0, eps=1.0, ip=1, key=None):
    """VATLoss(xi, eps, ip).forward(model, x) with `model` = 1x1 conv (W, b).
    Returns the scalar LDS loss."""
    xi = xi / (2.0 * 255.0)
    eps = eps / (2.0 * 255.0)
    if key is None:
        key = jax.random.PRNGKey(0)

    N, C, H, Wsp = x_nchw.shape
    HW = H * Wsp
    Cout, Cin = w.shape
    assert Cin == C
    inv_count = 1.0 / float(N * Cout * HW)     # 'mean' reduction of BCEWithLogits

    # (N, C, H, W) -> (N, C*HW): zero-cost view of the NCHW layout (no transpose op);
    # channels become static lane slices inside the kernel.
    x2d = x_nchw.astype(jnp.float32).reshape(N, C * HW)

    # Pad the batch to a multiple of 8 (full sublane occupancy); padded rows are
    # masked out of the BCE sum inside the kernel.
    N_pad = ((N + 7) // 8) * 8
    if N_pad != N:
        x2d = jnp.pad(x2d, ((0, N_pad - N), (0, 0)))

    # Random perturbation d0 ~ U[0,1) - 0.5, generated once (independent of tiling).
    d2d = jax.random.uniform(key, (N_pad, C * HW), jnp.float32) - 0.5

    w32 = w.astype(jnp.float32)                # (Cout, Cin) scalars -> SMEM
    b32 = b.astype(jnp.float32)                # (Cout,)     scalars -> SMEM

    TN = _choose_tn(N_pad, C * HW * 4)
    num_blocks = N_pad // TN

    kernel = _make_vat_kernel(xi, eps, ip, inv_count, C, Cout, TN, HW, N, N_pad)

    partials = pl.pallas_call(
        kernel,
        out_shape=jax.ShapeDtypeStruct((num_blocks, 8, 128), jnp.float32),
        grid=(num_blocks,),
        in_specs=[
            pl.BlockSpec((TN, C * HW), lambda i: (i, 0)),              # x block
            pl.BlockSpec((TN, C * HW), lambda i: (i, 0)),              # d block
            pl.BlockSpec(memory_space=pltpu.MemorySpace.SMEM),         # W (1x1 conv)
            pl.BlockSpec(memory_space=pltpu.MemorySpace.SMEM),         # bias
        ],
        out_specs=pl.BlockSpec((1, 8, 128), lambda i: (i, 0, 0)),      # partial losses
        compiler_params=pltpu.CompilerParams(
            dimension_semantics=("parallel",),     # shard blocks across TCs on v7x
            vmem_limit_bytes=32 * 1024 * 1024,
        ),
    )(x2d, d2d, w32, b32)

    return jnp.sum(partials[:, 0, 0])


def _vat_loss_ref(x_nchw, w, b, d0, *, xi, eps, ip):
    """Pure-JAX reference of VATLoss.forward with the same 1x1-conv model (for a
    numerical sanity check against the kernel)."""
    xi = xi / (2.0 * 255.0)
    eps = eps / (2.0 * 255.0)
    N, C, H, Wsp = x_nchw.shape
    x = x_nchw.astype(jnp.float32).reshape(N, C, H * Wsp)

    def model(v):
        return jnp.einsum("oc,nch->noh", w, v) + b[None, :, None]

    def l2n(v):
        nrm = jnp.sqrt(jnp.sum(v * v, axis=(1, 2), keepdims=True))
        return v / (nrm + 1e-8)

    pred = jax.nn.sigmoid(model(x))
    M = pred.size
    d = l2n(d0)
    for _ in range(ip):
        z = model(x + xi * d)
        dz = (jax.nn.sigmoid(z) - pred) / M
        d = l2n(xi * jnp.einsum("oc,noh->nch", w, dz))
    za = model(x + eps * d)
    bce = jnp.maximum(za, 0.0) - za * pred + jnp.log1p(jnp.exp(-jnp.abs(za)))
    return jnp.mean(bce)


if __name__ == "__main__":
    key = jax.random.PRNGKey(0)
    kx, kw, kd = jax.random.split(key, 3)

    N, C, H, Wsp = 2, 4, 16, 16
    Cout = 4

    # deterministic synthetic inputs / parameters
    x = jax.random.uniform(kx, (N, C, H, Wsp), jnp.float32)
    w = jax.random.normal(kw, (Cout, C), jnp.float32) * 0.1     # 1x1 conv weight
    b = jnp.linspace(-0.1, 0.1, Cout, dtype=jnp.float32)        # conv bias

    lds = vat_loss_pallas(x, w, b, xi=10.0, eps=1.0, ip=1, key=kd)
    jax.block_until_ready(lds)

    # sanity check against a pure-JAX reference using the identical perturbation d0
    N_pad = ((N + 7) // 8) * 8
    d0 = (jax.random.uniform(kd, (N_pad, C * H * Wsp), jnp.float32) - 0.5)[:N]
    d0 = d0.reshape(N, C, H * Wsp)
    ref = _vat_loss_ref(x, w, b, d0, xi=10.0, eps=1.0, ip=1)
    assert abs(float(lds) - float(ref)) <= 1e-4 * max(1.0, abs(float(ref))), (
        float(lds), float(ref))

    print("KERNEL_OK")
</pallas_src>

<mosaic_0001>
module attributes {stable_mosaic.version = 11 : i64} {
  func.func @kernel(%arg0: i32, %arg1: memref<8x1024xf32, #tpu.memory_space<vmem>>, %arg2: memref<8x1024xf32, #tpu.memory_space<vmem>>, %arg3: memref<4x4xf32, #tpu.memory_space<smem>>, %arg4: memref<4xf32, #tpu.memory_space<smem>>, %arg5: memref<1x8x128xf32, #tpu.memory_space<vmem>>) attributes {dimension_semantics = [#tpu.dimension_semantics<parallel>], iteration_bounds = array<i64: 1>, scalar_prefetch = 0 : i64, scratch_operands = 0 : i64, tpu.core_type = #tpu.core_type<tc>, window_params = [{transform_indices = @transform_0, window_bounds = array<i64: 8, 1024>}, {transform_indices = @transform_1, window_bounds = array<i64: 8, 1024>}, {transform_indices = @transform_2, window_bounds = array<i64: 4, 4>}, {transform_indices = @transform_3, window_bounds = array<i64: 4>}, {transform_indices = @transform_4, window_bounds = array<i64: 1, 8, 128>}]} {
    %c0 = arith.constant 0 : index
    %c0_0 = arith.constant 0 : index
    %0 = memref.load %arg3[%c0, %c0_0] : memref<4x4xf32, #tpu.memory_space<smem>>
    %c0_1 = arith.constant 0 : index
    %c1 = arith.constant 1 : index
    %1 = memref.load %arg3[%c0_1, %c1] : memref<4x4xf32, #tpu.memory_space<smem>>
    %c0_2 = arith.constant 0 : index
    %c2 = arith.constant 2 : index
    %2 = memref.load %arg3[%c0_2, %c2] : memref<4x4xf32, #tpu.memory_space<smem>>
    %c0_3 = arith.constant 0 : index
    %c3 = arith.constant 3 : index
    %3 = memref.load %arg3[%c0_3, %c3] : memref<4x4xf32, #tpu.memory_space<smem>>
    %c1_4 = arith.constant 1 : index
    %c0_5 = arith.constant 0 : index
    %4 = memref.load %arg3[%c1_4, %c0_5] : memref<4x4xf32, #tpu.memory_space<smem>>
    %c1_6 = arith.constant 1 : index
    %c1_7 = arith.constant 1 : index
    %5 = memref.load %arg3[%c1_6, %c1_7] : memref<4x4xf32, #tpu.memory_space<smem>>
    %c1_8 = arith.constant 1 : index
    %c2_9 = arith.constant 2 : index
    %6 = memref.load %arg3[%c1_8, %c2_9] : memref<4x4xf32, #tpu.memory_space<smem>>
    %c1_10 = arith.constant 1 : index
    %c3_11 = arith.constant 3 : index
    %7 = memref.load %arg3[%c1_10, %c3_11] : memref<4x4xf32, #tpu.memory_space<smem>>
    %c2_12 = arith.constant 2 : index
    %c0_13 = arith.constant 0 : index
    %8 = memref.load %arg3[%c2_12, %c0_13] : memref<4x4xf32, #tpu.memory_space<smem>>
    %c2_14 = arith.constant 2 : index
    %c1_15 = arith.constant 1 : index
    %9 = memref.load %arg3[%c2_14, %c1_15] : memref<4x4xf32, #tpu.memory_space<smem>>
    %c2_16 = arith.constant 2 : index
    %c2_17 = arith.constant 2 : index
    %10 = memref.load %arg3[%c2_16, %c2_17] : memref<4x4xf32, #tpu.memory_space<smem>>
    %c2_18 = arith.constant 2 : index
    %c3_19 = arith.constant 3 : index
    %11 = memref.load %arg3[%c2_18, %c3_19] : memref<4x4xf32, #tpu.memory_space<smem>>
    %c3_20 = arith.constant 3 : index
    %c0_21 = arith.constant 0 : index
    %12 = memref.load %arg3[%c3_20, %c0_21] : memref<4x4xf32, #tpu.memory_space<smem>>
    %c3_22 = arith.constant 3 : index
    %c1_23 = arith.constant 1 : index
    %13 = memref.load %arg3[%c3_22, %c1_23] : memref<4x4xf32, #tpu.memory_space<smem>>
    %c3_24 = arith.constant 3 : index
    %c2_25 = arith.constant 2 : index
    %14 = memref.load %arg3[%c3_24, %c2_25] : memref<4x4xf32, #tpu.memory_space<smem>>
    %c3_26 = arith.constant 3 : index
    %c3_27 = arith.constant 3 : index
    %15 = memref.load %arg3[%c3_26, %c3_27] : memref<4x4xf32, #tpu.memory_space<smem>>
    %c0_28 = arith.constant 0 : index
    %16 = memref.load %arg4[%c0_28] : memref<4xf32, #tpu.memory_space<smem>>
    %c1_29 = arith.constant 1 : index
    %17 = memref.load %arg4[%c1_29] : memref<4xf32, #tpu.memory_space<smem>>
    %c2_30 = arith.constant 2 : index
    %18 = memref.load %arg4[%c2_30] : memref<4xf32, #tpu.memory_space<smem>>
    %c3_31 = arith.constant 3 : index
    %19 = memref.load %arg4[%c3_31] : memref<4xf32, #tpu.memory_space<smem>>
    %c0_32 = arith.constant 0 : index
    %c0_33 = arith.constant 0 : index
    %20 = vector.load %arg1[%c0_32, %c0_33] : memref<8x1024xf32, #tpu.memory_space<vmem>>, vector<8x256xf32>
    %c0_34 = arith.constant 0 : index
    %c256 = arith.constant 256 : index
    %21 = vector.load %arg1[%c0_34, %c256] : memref<8x1024xf32, #tpu.memory_space<vmem>>, vector<8x256xf32>
    %c0_35 = arith.constant 0 : index
    %c512 = arith.constant 512 : index
    %22 = vector.load %arg1[%c0_35, %c512] : memref<8x1024xf32, #tpu.memory_space<vmem>>, vector<8x256xf32>
    %c0_36 = arith.constant 0 : index
    %c768 = arith.constant 768 : index
    %23 = vector.load %arg1[%c0_36, %c768] : memref<8x1024xf32, #tpu.memory_space<vmem>>, vector<8x256xf32>
    %24 = vector.broadcast %0 : f32 to vector<8x256xf32>
    %25 = arith.mulf %20, %24 : vector<8x256xf32>
    %26 = vector.broadcast %1 : f32 to vector<8x256xf32>
    %27 = arith.mulf %21, %26 : vector<8x256xf32>
    %28 = arith.addf %25, %27 : vector<8x256xf32>
    %29 = vector.broadcast %2 : f32 to vector<8x256xf32>
    %30 = arith.mulf %22, %29 : vector<8x256xf32>
    %31 = arith.addf %28, %30 : vector<8x256xf32>
    %32 = vector.broadcast %3 : f32 to vector<8x256xf32>
    %33 = arith.mulf %23, %32 : vector<8x256xf32>
    %34 = arith.addf %31, %33 : vector<8x256xf32>
    %35 = vector.broadcast %16 : f32 to vector<8x256xf32>
    %36 = arith.addf %34, %35 : vector<8x256xf32>
    %37 = vector.broadcast %4 : f32 to vector<8x256xf32>
    %38 = arith.mulf %20, %37 : vector<8x256xf32>
    %39 = vector.broadcast %5 : f32 to vector<8x256xf32>
    %40 = arith.mulf %21, %39 : vector<8x256xf32>
    %41 = arith.addf %38, %40 : vector<8x256xf32>
    %42 = vector.broadcast %6 : f32 to vector<8x256xf32>
    %43 = arith.mulf %22, %42 : vector<8x256xf32>
    %44 = arith.addf %41, %43 : vector<8x256xf32>
    %45 = vector.broadcast %7 : f32 to vector<8x256xf32>
    %46 = arith.mulf %23, %45 : vector<8x256xf32>
    %47 = arith.addf %44, %46 : vector<8x256xf32>
    %48 = vector.broadcast %17 : f32 to vector<8x256xf32>
    %49 = arith.addf %47, %48 : vector<8x256xf32>
    %50 = vector.broadcast %8 : f32 to vector<8x256xf32>
    %51 = arith.mulf %20, %50 : vector<8x256xf32>
    %52 = vector.broadcast %9 : f32 to vector<8x256xf32>
    %53 = arith.mulf %21, %52 : vector<8x256xf32>
    %54 = arith.addf %51, %53 : vector<8x256xf32>
    %55 = vector.broadcast %10 : f32 to vector<8x256xf32>
    %56 = arith.mulf %22, %55 : vector<8x256xf32>
    %57 = arith.addf %54, %56 : vector<8x256xf32>
    %58 = vector.broadcast %11 : f32 to vector<8x256xf32>
    %59 = arith.mulf %23, %58 : vector<8x256xf32>
    %60 = arith.addf %57, %59 : vector<8x256xf32>
    %61 = vector.broadcast %18 : f32 to vector<8x256xf32>
    %62 = arith.addf %60, %61 : vector<8x256xf32>
    %63 = vector.broadcast %12 : f32 to vector<8x256xf32>
    %64 = arith.mulf %20, %63 : vector<8x256xf32>
    %65 = vector.broadcast %13 : f32 to vector<8x256xf32>
    %66 = arith.mulf %21, %65 : vector<8x256xf32>
    %67 = arith.addf %64, %66 : vector<8x256xf32>
    %68 = vector.broadcast %14 : f32 to vector<8x256xf32>
    %69 = arith.mulf %22, %68 : vector<8x256xf32>
    %70 = arith.addf %67, %69 : vector<8x256xf32>
    %71 = vector.broadcast %15 : f32 to vector<8x256xf32>
    %72 = arith.mulf %23, %71 : vector<8x256xf32>
    %73 = arith.addf %70, %72 : vector<8x256xf32>
    %74 = vector.broadcast %19 : f32 to vector<8x256xf32>
    %75 = arith.addf %73, %74 : vector<8x256xf32>
    %76 = arith.negf %36 : vector<8x256xf32>
    %77 = math.exp %76 : vector<8x256xf32>
    %cst = arith.constant 1.000000e+00 : f32
    %78 = vector.broadcast %cst : f32 to vector<8x256xf32>
    %79 = arith.addf %78, %77 : vector<8x256xf32>
    %80 = arith.divf %78, %79 : vector<8x256xf32>
    %81 = arith.negf %49 : vector<8x256xf32>
    %82 = math.exp %81 : vector<8x256xf32>
    %cst_37 = arith.constant 1.000000e+00 : f32
    %83 = vector.broadcast %cst_37 : f32 to vector<8x256xf32>
    %84 = arith.addf %83, %82 : vector<8x256xf32>
    %85 = arith.divf %83, %84 : vector<8x256xf32>
    %86 = arith.negf %62 : vector<8x256xf32>
    %87 = math.exp %86 : vector<8x256xf32>
    %cst_38 = arith.constant 1.000000e+00 : f32
    %88 = vector.broadcast %cst_38 : f32 to vector<8x256xf32>
    %89 = arith.addf %88, %87 : vector<8x256xf32>
    %90 = arith.divf %88, %89 : vector<8x256xf32>
    %91 = arith.negf %75 : vector<8x256xf32>
    %92 = math.exp %91 : vector<8x256xf32>
    %cst_39 = arith.constant 1.000000e+00 : f32
    %93 = vector.broadcast %cst_39 : f32 to vector<8x256xf32>
    %94 = arith.addf %93, %92 : vector<8x256xf32>
    %95 = arith.divf %93, %94 : vector<8x256xf32>
    %c0_40 = arith.constant 0 : index
    %c0_41 = arith.constant 0 : index
    %96 = vector.load %arg2[%c0_40, %c0_41] : memref<8x1024xf32, #tpu.memory_space<vmem>>, vector<8x256xf32>
    %c0_42 = arith.constant 0 : index
    %c256_43 = arith.constant 256 : index
    %97 = vector.load %arg2[%c0_42, %c256_43] : memref<8x1024xf32, #tpu.memory_space<vmem>>, vector<8x256xf32>
    %c0_44 = arith.constant 0 : index
    %c512_45 = arith.constant 512 : index
    %98 = vector.load %arg2[%c0_44, %c512_45] : memref<8x1024xf32, #tpu.memory_space<vmem>>, vector<8x256xf32>
    %c0_46 = arith.constant 0 : index
    %c768_47 = arith.constant 768 : index
    %99 = vector.load %arg2[%c0_46, %c768_47] : memref<8x1024xf32, #tpu.memory_space<vmem>>, vector<8x256xf32>
    %100 = arith.mulf %96, %96 : vector<8x256xf32>
    %cst_48 = arith.constant dense<0.000000e+00> : vector<8xf32>
    %101 = vector.multi_reduction <add>, %100, %cst_48 [1] : vector<8x256xf32> to vector<8xf32>
    %102 = vector.shape_cast %101 : vector<8xf32> to vector<8x1xf32>
    %103 = arith.mulf %97, %97 : vector<8x256xf32>
    %cst_49 = arith.constant dense<0.000000e+00> : vector<8xf32>
    %104 = vector.multi_reduction <add>, %103, %cst_49 [1] : vector<8x256xf32> to vector<8xf32>
    %105 = vector.shape_cast %104 : vector<8xf32> to vector<8x1xf32>
    %106 = arith.addf %102, %105 : vector<8x1xf32>
    %107 = arith.mulf %98, %98 : vector<8x256xf32>
    %cst_50 = arith.constant dense<0.000000e+00> : vector<8xf32>
    %108 = vector.multi_reduction <add>, %107, %cst_50 [1] : vector<8x256xf32> to vector<8xf32>
    %109 = vector.shape_cast %108 : vector<8xf32> to vector<8x1xf32>
    %110 = arith.addf %106, %109 : vector<8x1xf32>
    %111 = arith.mulf %99, %99 : vector<8x256xf32>
    %cst_51 = arith.constant dense<0.000000e+00> : vector<8xf32>
    %112 = vector.multi_reduction <add>, %111, %cst_51 [1] : vector<8x256xf32> to vector<8xf32>
    %113 = vector.shape_cast %112 : vector<8xf32> to vector<8x1xf32>
    %114 = arith.addf %110, %113 : vector<8x1xf32>
    %115 = math.sqrt %114 : vector<8x1xf32>
    %cst_52 = arith.constant 9.99999993E-9 : f32
    %116 = vector.broadcast %cst_52 : f32 to vector<8x1xf32>
    %117 = arith.addf %115, %116 : vector<8x1xf32>
    %cst_53 = arith.constant 1.000000e+00 : f32
    %118 = vector.broadcast %cst_53 : f32 to vector<8x1xf32>
    %119 = arith.divf %118, %117 : vector<8x1xf32>
    %120 = vector.broadcast %119 : vector<8x1xf32> to vector<8x256xf32>
    %121 = arith.mulf %96, %120 : vector<8x256xf32>
    %122 = vector.broadcast %119 : vector<8x1xf32> to vector<8x256xf32>
    %123 = arith.mulf %97, %122 : vector<8x256xf32>
    %124 = vector.broadcast %119 : vector<8x1xf32> to vector<8x256xf32>
    %125 = arith.mulf %98, %124 : vector<8x256xf32>
    %126 = vector.broadcast %119 : vector<8x1xf32> to vector<8x256xf32>
    %127 = arith.mulf %99, %126 : vector<8x256xf32>
    %128 = vector.broadcast %0 : f32 to vector<8x256xf32>
    %129 = arith.mulf %121, %128 : vector<8x256xf32>
    %130 = vector.broadcast %1 : f32 to vector<8x256xf32>
    %131 = arith.mulf %123, %130 : vector<8x256xf32>
    %132 = arith.addf %129, %131 : vector<8x256xf32>
    %133 = vector.broadcast %2 : f32 to vector<8x256xf32>
    %134 = arith.mulf %125, %133 : vector<8x256xf32>
    %135 = arith.addf %132, %134 : vector<8x256xf32>
    %136 = vector.broadcast %3 : f32 to vector<8x256xf32>
    %137 = arith.mulf %127, %136 : vector<8x256xf32>
    %138 = arith.addf %135, %137 : vector<8x256xf32>
    %cst_54 = arith.constant 0.0196078438 : f32
    %139 = vector.broadcast %cst_54 : f32 to vector<8x256xf32>
    %140 = arith.mulf %139, %138 : vector<8x256xf32>
    %141 = arith.addf %36, %140 : vector<8x256xf32>
    %142 = arith.negf %141 : vector<8x256xf32>
    %143 = math.exp %142 : vector<8x256xf32>
    %cst_55 = arith.constant 1.000000e+00 : f32
    %144 = vector.broadcast %cst_55 : f32 to vector<8x256xf32>
    %145 = arith.addf %144, %143 : vector<8x256xf32>
    %146 = arith.divf %144, %145 : vector<8x256xf32>
    %147 = arith.subf %146, %80 : vector<8x256xf32>
    %148 = vector.broadcast %0 : f32 to vector<8x256xf32>
    %149 = arith.mulf %147, %148 : vector<8x256xf32>
    %150 = vector.broadcast %1 : f32 to vector<8x256xf32>
    %151 = arith.mulf %147, %150 : vector<8x256xf32>
    %152 = vector.broadcast %2 : f32 to vector<8x256xf32>
    %153 = arith.mulf %147, %152 : vector<8x256xf32>
    %154 = vector.broadcast %3 : f32 to vector<8x256xf32>
    %155 = arith.mulf %147, %154 : vector<8x256xf32>
    %156 = vector.broadcast %4 : f32 to vector<8x256xf32>
    %157 = arith.mulf %121, %156 : vector<8x256xf32>
    %158 = vector.broadcast %5 : f32 to vector<8x256xf32>
    %159 = arith.mulf %123, %158 : vector<8x256xf32>
    %160 = arith.addf %157, %159 : vector<8x256xf32>
    %161 = vector.broadcast %6 : f32 to vector<8x256xf32>
    %162 = arith.mulf %125, %161 : vector<8x256xf32>
    %163 = arith.addf %160, %162 : vector<8x256xf32>
    %164 = vector.broadcast %7 : f32 to vector<8x256xf32>
    %165 = arith.mulf %127, %164 : vector<8x256xf32>
    %166 = arith.addf %163, %165 : vector<8x256xf32>
    %cst_56 = arith.constant 0.0196078438 : f32
    %167 = vector.broadcast %cst_56 : f32 to vector<8x256xf32>
    %168 = arith.mulf %167, %166 : vector<8x256xf32>
    %169 = arith.addf %49, %168 : vector<8x256xf32>
    %170 = arith.negf %169 : vector<8x256xf32>
    %171 = math.exp %170 : vector<8x256xf32>
    %cst_57 = arith.constant 1.000000e+00 : f32
    %172 = vector.broadcast %cst_57 : f32 to vector<8x256xf32>
    %173 = arith.addf %172, %171 : vector<8x256xf32>
    %174 = arith.divf %172, %173 : vector<8x256xf32>
    %175 = arith.subf %174, %85 : vector<8x256xf32>
    %176 = vector.broadcast %4 : f32 to vector<8x256xf32>
    %177 = arith.mulf %175, %176 : vector<8x256xf32>
    %178 = arith.addf %149, %177 : vector<8x256xf32>
    %179 = vector.broadcast %5 : f32 to vector<8x256xf32>
    %180 = arith.mulf %175, %179 : vector<8x256xf32>
    %181 = arith.addf %151, %180 : vector<8x256xf32>
    %182 = vector.broadcast %6 : f32 to vector<8x256xf32>
    %183 = arith.mulf %175, %182 : vector<8x256xf32>
    %184 = arith.addf %153, %183 : vector<8x256xf32>
    %185 = vector.broadcast %7 : f32 to vector<8x256xf32>
    %186 = arith.mulf %175, %185 : vector<8x256xf32>
    %187 = arith.addf %155, %186 : vector<8x256xf32>
    %188 = vector.broadcast %8 : f32 to vector<8x256xf32>
    %189 = arith.mulf %121, %188 : vector<8x256xf32>
    %190 = vector.broadcast %9 : f32 to vector<8x256xf32>
    %191 = arith.mulf %123, %190 : vector<8x256xf32>
    %192 = arith.addf %189, %191 : vector<8x256xf32>
    %193 = vector.broadcast %10 : f32 to vector<8x256xf32>
    %194 = arith.mulf %125, %193 : vector<8x256xf32>
    %195 = arith.addf %192, %194 : vector<8x256xf32>
    %196 = vector.broadcast %11 : f32 to vector<8x256xf32>
    %197 = arith.mulf %127, %196 : vector<8x256xf32>
    %198 = arith.addf %195, %197 : vector<8x256xf32>
    %cst_58 = arith.constant 0.0196078438 : f32
    %199 = vector.broadcast %cst_58 : f32 to vector<8x256xf32>
    %200 = arith.mulf %199, %198 : vector<8x256xf32>
    %201 = arith.addf %62, %200 : vector<8x256xf32>
    %202 = arith.negf %201 : vector<8x256xf32>
    %203 = math.exp %202 : vector<8x256xf32>
    %cst_59 = arith.constant 1.000000e+00 : f32
    %204 = vector.broadcast %cst_59 : f32 to vector<8x256xf32>
    %205 = arith.addf %204, %203 : vector<8x256xf32>
    %206 = arith.divf %204, %205 : vector<8x256xf32>
    %207 = arith.subf %206, %90 : vector<8x256xf32>
    %208 = vector.broadcast %8 : f32 to vector<8x256xf32>
    %209 = arith.mulf %207, %208 : vector<8x256xf32>
    %210 = arith.addf %178, %209 : vector<8x256xf32>
    %211 = vector.broadcast %9 : f32 to vector<8x256xf32>
    %212 = arith.mulf %207, %211 : vector<8x256xf32>
    %213 = arith.addf %181, %212 : vector<8x256xf32>
    %214 = vector.broadcast %10 : f32 to vector<8x256xf32>
    %215 = arith.mulf %207, %214 : vector<8x256xf32>
    %216 = arith.addf %184, %215 : vector<8x256xf32>
    %217 = vector.broadcast %11 : f32 to vector<8x256xf32>
    %218 = arith.mulf %207, %217 : vector<8x256xf32>
    %219 = arith.addf %187, %218 : vector<8x256xf32>
    %220 = vector.broadcast %12 : f32 to vector<8x256xf32>
    %221 = arith.mulf %121, %220 : vector<8x256xf32>
    %222 = vector.broadcast %13 : f32 to vector<8x256xf32>
    %223 = arith.mulf %123, %222 : vector<8x256xf32>
    %224 = arith.addf %221, %223 : vector<8x256xf32>
    %225 = vector.broadcast %14 : f32 to vector<8x256xf32>
    %226 = arith.mulf %125, %225 : vector<8x256xf32>
    %227 = arith.addf %224, %226 : vector<8x256xf32>
    %228 = vector.broadcast %15 : f32 to vector<8x256xf32>
    %229 = arith.mulf %127, %228 : vector<8x256xf32>
    %230 = arith.addf %227, %229 : vector<8x256xf32>
    %cst_60 = arith.constant 0.0196078438 : f32
    %231 = vector.broadcast %cst_60 : f32 to vector<8x256xf32>
    %232 = arith.mulf %231, %230 : vector<8x256xf32>
    %233 = arith.addf %75, %232 : vector<8x256xf32>
    %234 = arith.negf %233 : vector<8x256xf32>
    %235 = math.exp %234 : vector<8x256xf32>
    %cst_61 = arith.constant 1.000000e+00 : f32
    %236 = vector.broadcast %cst_61 : f32 to vector<8x256xf32>
    %237 = arith.addf %236, %235 : vector<8x256xf32>
    %238 = arith.divf %236, %237 : vector<8x256xf32>
    %239 = arith.subf %238, %95 : vector<8x256xf32>
    %240 = vector.broadcast %12 : f32 to vector<8x256xf32>
    %241 = arith.mulf %239, %240 : vector<8x256xf32>
    %242 = arith.addf %210, %241 : vector<8x256xf32>
    %243 = vector.broadcast %13 : f32 to vector<8x256xf32>
    %244 = arith.mulf %239, %243 : vector<8x256xf32>
    %245 = arith.addf %213, %244 : vector<8x256xf32>
    %246 = vector.broadcast %14 : f32 to vector<8x256xf32>
    %247 = arith.mulf %239, %246 : vector<8x256xf32>
    %248 = arith.addf %216, %247 : vector<8x256xf32>
    %249 = vector.broadcast %15 : f32 to vector<8x256xf32>
    %250 = arith.mulf %239, %249 : vector<8x256xf32>
    %251 = arith.addf %219, %250 : vector<8x256xf32>
    %252 = arith.mulf %242, %242 : vector<8x256xf32>
    %cst_62 = arith.constant dense<0.000000e+00> : vector<8xf32>
    %253 = vector.multi_reduction <add>, %252, %cst_62 [1] : vector<8x256xf32> to vector<8xf32>
    %254 = vector.shape_cast %253 : vector<8xf32> to vector<8x1xf32>
    %255 = arith.mulf %245, %245 : vector<8x256xf32>
    %cst_63 = arith.constant dense<0.000000e+00> : vector<8xf32>
    %256 = vector.multi_reduction <add>, %255, %cst_63 [1] : vector<8x256xf32> to vector<8xf32>
    %257 = vector.shape_cast %256 : vector<8xf32> to vector<8x1xf32>
    %258 = arith.addf %254, %257 : vector<8x1xf32>
    %259 = arith.mulf %248, %248 : vector<8x256xf32>
    %cst_64 = arith.constant dense<0.000000e+00> : vector<8xf32>
    %260 = vector.multi_reduction <add>, %259, %cst_64 [1] : vector<8x256xf32> to vector<8xf32>
    %261 = vector.shape_cast %260 : vector<8xf32> to vector<8x1xf32>
    %262 = arith.addf %258, %261 : vector<8x1xf32>
    %263 = arith.mulf %251, %251 : vector<8x256xf32>
    %cst_65 = arith.constant dense<0.000000e+00> : vector<8xf32>
    %264 = vector.multi_reduction <add>, %263, %cst_65 [1] : vector<8x256xf32> to vector<8xf32>
    %265 = vector.shape_cast %264 : vector<8xf32> to vector<8x1xf32>
    %266 = arith.addf %262, %265 : vector<8x1xf32>
    %267 = math.sqrt %266 : vector<8x1xf32>
    %cst_66 = arith.constant 9.99999993E-9 : f32
    %268 = vector.broadcast %cst_66 : f32 to vector<8x1xf32>
    %269 = arith.addf %267, %268 : vector<8x1xf32>
    %cst_67 = arith.constant 1.000000e+00 : f32
    %270 = vector.broadcast %cst_67 : f32 to vector<8x1xf32>
    %271 = arith.divf %270, %269 : vector<8x1xf32>
    %272 = vector.broadcast %271 : vector<8x1xf32> to vector<8x256xf32>
    %273 = arith.mulf %242, %272 : vector<8x256xf32>
    %274 = vector.broadcast %271 : vector<8x1xf32> to vector<8x256xf32>
    %275 = arith.mulf %245, %274 : vector<8x256xf32>
    %276 = vector.broadcast %271 : vector<8x1xf32> to vector<8x256xf32>
    %277 = arith.mulf %248, %276 : vector<8x256xf32>
    %278 = vector.broadcast %271 : vector<8x1xf32> to vector<8x256xf32>
    %279 = arith.mulf %251, %278 : vector<8x256xf32>
    %280 = tpu.iota {dimensions = array<i32: 0>} : vector<8x1xi32>
    %c8_i32 = arith.constant 8 : i32
    %281 = arith.muli %arg0, %c8_i32 : i32
    %282 = vector.broadcast %281 : i32 to vector<8x1xi32>
    %283 = arith.addi %280, %282 : vector<8x1xi32>
    %c2_i32 = arith.constant 2 : i32
    %284 = vector.broadcast %c2_i32 : i32 to vector<8x1xi32>
    %285 = arith.cmpi slt, %283, %284 : vector<8x1xi32>
    %286 = arith.extui %285 : vector<8x1xi1> to vector<8x1xi32>
    %287 = arith.sitofp %286 : vector<8x1xi32> to vector<8x1xf32>
    %288 = vector.broadcast %0 : f32 to vector<8x256xf32>
    %289 = arith.mulf %273, %288 : vector<8x256xf32>
    %290 = vector.broadcast %1 : f32 to vector<8x256xf32>
    %291 = arith.mulf %275, %290 : vector<8x256xf32>
    %292 = arith.addf %289, %291 : vector<8x256xf32>
    %293 = vector.broadcast %2 : f32 to vector<8x256xf32>
    %294 = arith.mulf %277, %293 : vector<8x256xf32>
    %295 = arith.addf %292, %294 : vector<8x256xf32>
    %296 = vector.broadcast %3 : f32 to vector<8x256xf32>
    %297 = arith.mulf %279, %296 : vector<8x256xf32>
    %298 = arith.addf %295, %297 : vector<8x256xf32>
    %cst_68 = arith.constant 0.00196078443 : f32
    %299 = vector.broadcast %cst_68 : f32 to vector<8x256xf32>
    %300 = arith.mulf %299, %298 : vector<8x256xf32>
    %301 = arith.addf %36, %300 : vector<8x256xf32>
    %cst_69 = arith.constant 0.000000e+00 : f32
    %302 = vector.broadcast %cst_69 : f32 to vector<8x256xf32>
    %303 = arith.maximumf %301, %302 : vector<8x256xf32>
    %304 = arith.mulf %301, %80 : vector<8x256xf32>
    %305 = arith.subf %303, %304 : vector<8x256xf32>
    %306 = math.absf %301 : vector<8x256xf32>
    %cst_70 = arith.constant 0.000000e+00 : f32
    %307 = vector.broadcast %cst_70 : f32 to vector<8x256xf32>
    %308 = arith.subf %307, %306 : vector<8x256xf32>
    %309 = math.exp %308 : vector<8x256xf32>
    %310 = math.log1p %309 : vector<8x256xf32>
    %311 = arith.addf %305, %310 : vector<8x256xf32>
    %cst_71 = arith.constant dense<0.000000e+00> : vector<8xf32>
    %312 = vector.multi_reduction <add>, %311, %cst_71 [1] : vector<8x256xf32> to vector<8xf32>
    %313 = vector.shape_cast %312 : vector<8xf32> to vector<8x1xf32>
    %314 = arith.mulf %313, %287 : vector<8x1xf32>
    %315 = vector.shape_cast %314 : vector<8x1xf32> to vector<1x8x1xf32>
    %cst_72 = arith.constant dense<0.000000e+00> : vector<1xf32>
    %316 = vector.multi_reduction <add>, %315, %cst_72 [1, 2] : vector<1x8x1xf32> to vector<1xf32>
    %317 = vector.shape_cast %316 : vector<1xf32> to vector<1x1x1xf32>
    %318 = vector.extract %317[0, 0, 0] : f32 from vector<1x1x1xf32>
    %cst_73 = arith.constant 0.000000e+00 : f32
    %319 = arith.addf %cst_73, %318 : f32
    %320 = vector.broadcast %4 : f32 to vector<8x256xf32>
    %321 = arith.mulf %273, %320 : vector<8x256xf32>
    %322 = vector.broadcast %5 : f32 to vector<8x256xf32>
    %323 = arith.mulf %275, %322 : vector<8x256xf32>
    %324 = arith.addf %321, %323 : vector<8x256xf32>
    %325 = vector.broadcast %6 : f32 to vector<8x256xf32>
    %326 = arith.mulf %277, %325 : vector<8x256xf32>
    %327 = arith.addf %324, %326 : vector<8x256xf32>
    %328 = vector.broadcast %7 : f32 to vector<8x256xf32>
    %329 = arith.mulf %279, %328 : vector<8x256xf32>
    %330 = arith.addf %327, %329 : vector<8x256xf32>
    %cst_74 = arith.constant 0.00196078443 : f32
    %331 = vector.broadcast %cst_74 : f32 to vector<8x256xf32>
    %332 = arith.mulf %331, %330 : vector<8x256xf32>
    %333 = arith.addf %49, %332 : vector<8x256xf32>
    %cst_75 = arith.constant 0.000000e+00 : f32
    %334 = vector.broadcast %cst_75 : f32 to vector<8x256xf32>
    %335 = arith.maximumf %333, %334 : vector<8x256xf32>
    %336 = arith.mulf %333, %85 : vector<8x256xf32>
    %337 = arith.subf %335, %336 : vector<8x256xf32>
    %338 = math.absf %333 : vector<8x256xf32>
    %cst_76 = arith.constant 0.000000e+00 : f32
    %339 = vector.broadcast %cst_76 : f32 to vector<8x256xf32>
    %340 = arith.subf %339, %338 : vector<8x256xf32>
    %341 = math.exp %340 : vector<8x256xf32>
    %342 = math.log1p %341 : vector<8x256xf32>
    %343 = arith.addf %337, %342 : vector<8x256xf32>
    %cst_77 = arith.constant dense<0.000000e+00> : vector<8xf32>
    %344 = vector.multi_reduction <add>, %343, %cst_77 [1] : vector<8x256xf32> to vector<8xf32>
    %345 = vector.shape_cast %344 : vector<8xf32> to vector<8x1xf32>
    %346 = arith.mulf %345, %287 : vector<8x1xf32>
    %347 = vector.shape_cast %346 : vector<8x1xf32> to vector<1x8x1xf32>
    %cst_78 = arith.constant dense<0.000000e+00> : vector<1xf32>
    %348 = vector.multi_reduction <add>, %347, %cst_78 [1, 2] : vector<1x8x1xf32> to vector<1xf32>
    %349 = vector.shape_cast %348 : vector<1xf32> to vector<1x1x1xf32>
    %350 = vector.extract %349[0, 0, 0] : f32 from vector<1x1x1xf32>
    %351 = arith.addf %319, %350 : f32
    %352 = vector.broadcast %8 : f32 to vector<8x256xf32>
    %353 = arith.mulf %273, %352 : vector<8x256xf32>
    %354 = vector.broadcast %9 : f32 to vector<8x256xf32>
    %355 = arith.mulf %275, %354 : vector<8x256xf32>
    %356 = arith.addf %353, %355 : vector<8x256xf32>
    %357 = vector.broadcast %10 : f32 to vector<8x256xf32>
    %358 = arith.mulf %277, %357 : vector<8x256xf32>
    %359 = arith.addf %356, %358 : vector<8x256xf32>
    %360 = vector.broadcast %11 : f32 to vector<8x256xf32>
    %361 = arith.mulf %279, %360 : vector<8x256xf32>
    %362 = arith.addf %359, %361 : vector<8x256xf32>
    %cst_79 = arith.constant 0.00196078443 : f32
    %363 = vector.broadcast %cst_79 : f32 to vector<8x256xf32>
    %364 = arith.mulf %363, %362 : vector<8x256xf32>
    %365 = arith.addf %62, %364 : vector<8x256xf32>
    %cst_80 = arith.constant 0.000000e+00 : f32
    %366 = vector.broadcast %cst_80 : f32 to vector<8x256xf32>
    %367 = arith.maximumf %365, %366 : vector<8x256xf32>
    %368 = arith.mulf %365, %90 : vector<8x256xf32>
    %369 = arith.subf %367, %368 : vector<8x256xf32>
    %370 = math.absf %365 : vector<8x256xf32>
    %cst_81 = arith.constant 0.000000e+00 : f32
    %371 = vector.broadcast %cst_81 : f32 to vector<8x256xf32>
    %372 = arith.subf %371, %370 : vector<8x256xf32>
    %373 = math.exp %372 : vector<8x256xf32>
    %374 = math.log1p %373 : vector<8x256xf32>
    %375 = arith.addf %369, %374 : vector<8x256xf32>
    %cst_82 = arith.constant dense<0.000000e+00> : vector<8xf32>
    %376 = vector.multi_reduction <add>, %375, %cst_82 [1] : vector<8x256xf32> to vector<8xf32>
    %377 = vector.shape_cast %376 : vector<8xf32> to vector<8x1xf32>
    %378 = arith.mulf %377, %287 : vector<8x1xf32>
    %379 = vector.shape_cast %378 : vector<8x1xf32> to vector<1x8x1xf32>
    %cst_83 = arith.constant dense<0.000000e+00> : vector<1xf32>
    %380 = vector.multi_reduction <add>, %379, %cst_83 [1, 2] : vector<1x8x1xf32> to vector<1xf32>
    %381 = vector.shape_cast %380 : vector<1xf32> to vector<1x1x1xf32>
    %382 = vector.extract %381[0, 0, 0] : f32 from vector<1x1x1xf32>
    %383 = arith.addf %351, %382 : f32
    %384 = vector.broadcast %12 : f32 to vector<8x256xf32>
    %385 = arith.mulf %273, %384 : vector<8x256xf32>
    %386 = vector.broadcast %13 : f32 to vector<8x256xf32>
    %387 = arith.mulf %275, %386 : vector<8x256xf32>
    %388 = arith.addf %385, %387 : vector<8x256xf32>
    %389 = vector.broadcast %14 : f32 to vector<8x256xf32>
    %390 = arith.mulf %277, %389 : vector<8x256xf32>
    %391 = arith.addf %388, %390 : vector<8x256xf32>
    %392 = vector.broadcast %15 : f32 to vector<8x256xf32>
    %393 = arith.mulf %279, %392 : vector<8x256xf32>
    %394 = arith.addf %391, %393 : vector<8x256xf32>
    %cst_84 = arith.constant 0.00196078443 : f32
    %395 = vector.broadcast %cst_84 : f32 to vector<8x256xf32>
    %396 = arith.mulf %395, %394 : vector<8x256xf32>
    %397 = arith.addf %75, %396 : vector<8x256xf32>
    %cst_85 = arith.constant 0.000000e+00 : f32
    %398 = vector.broadcast %cst_85 : f32 to vector<8x256xf32>
    %399 = arith.maximumf %397, %398 : vector<8x256xf32>
    %400 = arith.mulf %397, %95 : vector<8x256xf32>
    %401 = arith.subf %399, %400 : vector<8x256xf32>
    %402 = math.absf %397 : vector<8x256xf32>
    %cst_86 = arith.constant 0.000000e+00 : f32
    %403 = vector.broadcast %cst_86 : f32 to vector<8x256xf32>
    %404 = arith.subf %403, %402 : vector<8x256xf32>
    %405 = math.exp %404 : vector<8x256xf32>
    %406 = math.log1p %405 : vector<8x256xf32>
    %407 = arith.addf %401, %406 : vector<8x256xf32>
    %cst_87 = arith.constant dense<0.000000e+00> : vector<8xf32>
    %408 = vector.multi_reduction <add>, %407, %cst_87 [1] : vector<8x256xf32> to vector<8xf32>
    %409 = vector.shape_cast %408 : vector<8xf32> to vector<8x1xf32>
    %410 = arith.mulf %409, %287 : vector<8x1xf32>
    %411 = vector.shape_cast %410 : vector<8x1xf32> to vector<1x8x1xf32>
    %cst_88 = arith.constant dense<0.000000e+00> : vector<1xf32>
    %412 = vector.multi_reduction <add>, %411, %cst_88 [1, 2] : vector<1x8x1xf32> to vector<1xf32>
    %413 = vector.shape_cast %412 : vector<1xf32> to vector<1x1x1xf32>
    %414 = vector.extract %413[0, 0, 0] : f32 from vector<1x1x1xf32>
    %415 = arith.addf %383, %414 : f32
    %cst_89 = arith.constant 4.8828125E-4 : f32
    %416 = arith.mulf %415, %cst_89 : f32
    %417 = vector.broadcast %416 : f32 to vector<1x8x128xf32>
    %c0_90 = arith.constant 0 : index
    %c0_91 = arith.constant 0 : index
    %c0_92 = arith.constant 0 : index
    %418 = vector.load %arg5[%c0_90, %c0_91, %c0_92] : memref<1x8x128xf32, #tpu.memory_space<vmem>>, vector<1x8x128xf32>
    tpu.vector_store %arg5[%c0_90, %c0_91, %c0_92], %417 {strides = array<i32>} : memref<1x8x128xf32, #tpu.memory_space<vmem>>, vector<1x8x128xf32>,
    return
  }
  func.func @transform_0(%arg0: i32) -> (i32, i32) {
    %c0_i32 = arith.constant 0 : i32
    %c0_i32_0 = arith.constant 0 : i32
    return %arg0, %c0_i32 : i32, i32
  }
  func.func @transform_1(%arg0: i32) -> (i32, i32) {
    %c0_i32 = arith.constant 0 : i32
    %c0_i32_0 = arith.constant 0 : i32
    return %arg0, %c0_i32 : i32, i32
  }
  func.func @transform_2(%arg0: i32) -> (i32, i32) {
    %c0_i32 = arith.constant 0 : i32
    %c0_i32_0 = arith.constant 0 : i32
    %c0_i32_1 = arith.constant 0 : i32
    return %c0_i32, %c0_i32_0 : i32, i32
  }
  func.func @transform_3(%arg0: i32) -> i32 {
    %c0_i32 = arith.constant 0 : i32
    %c0_i32_0 = arith.constant 0 : i32
    return %c0_i32 : i32
  }
  func.func @transform_4(%arg0: i32) -> (i32, i32, i32) {
    %c0_i32 = arith.constant 0 : i32
    %c0_i32_0 = arith.constant 0 : i32
    %c0_i32_1 = arith.constant 0 : i32
    return %arg0, %c0_i32, %c0_i32_0 : i32, i32, i32
  }
}

</mosaic_0001>

<llo_original>
// kernel: tpu_custom_call.1
$region0: #{tpu_custom_call.1}
  #allocation0 [shape = 'u32[]', space=smem, size = 0x4, offset = 0x4, fixed_abs, tag = 'smem constant byte address 0x4 - core index']
  #allocation1 [shape = 'u32[72,128]{1,0:T(1,128)}', space=vmem, size = 0x9000, scoped, tag = 'internal scratch']
  %s0 = inlined_call_operand.hbm [shape: f32[8,1024], index: 0, kind: input, shape index: {}]
  %s1 = inlined_call_operand.hbm [shape: f32[8,1024], index: 1, kind: input, shape index: {}]
  %s2 = inlined_call_operand.hbm [shape: f32[4,4], index: 2, kind: input, shape index: {}]
  %s3 = inlined_call_operand.vmem [shape: f32[4], index: 3, kind: input, shape index: {}]
  %s4 = inlined_call_operand.hbm [shape: f32[1,8,128], index: 4, kind: output, shape index: {}]
  %s5 = sld [smem:[#allocation0]]
  $region42: #{tpu_custom_call.1} parent=0
    _
  %s7 = ssub.s32 1, %s5
  %s8 = scalar_select 0, %s7, %s5
  $region1: #{tpu_custom_call.1} parent=0
    #allocation2 [shape = 'u8[32768]{0}', space=vmem, size = 0x8000, scoped, tag = 'input window, operand 0, single buffered']
    #allocation3 [shape = 's32[1]{0}', space=sflag, size = 0x4, scoped, tag = 'scoped memory for tpu_custom_call.1']
    #allocation4 [shape = 's32[1]{0}', space=sflag, size = 0x4, scoped, tag = 'scoped memory for tpu_custom_call.1']
    #allocation5 [shape = 's32[1]{0}', space=sflag, size = 0x4, scoped, tag = 'scoped memory for tpu_custom_call.1']
    #allocation6 [shape = 's32[1]{0}', space=sflag, size = 0x4, scoped, tag = 'scoped memory for tpu_custom_call.1']
    #allocation7 [shape = 'u8[32768]{0}', space=vmem, size = 0x8000, scoped, tag = 'input window, operand 1, single buffered']
    #allocation8 [shape = 's32[1]{0}', space=sflag, size = 0x4, scoped, tag = 'scoped memory for tpu_custom_call.1']
    #allocation9 [shape = 'u8[2048]{0}', space=smem, size = 0x800, scoped, tag = 'input window, operand 2, single buffered']
    #allocation10 [shape = 'u8[512]{0}', space=smem, size = 0x200, scoped, tag = 'input window, operand 3, single buffered']
    #allocation11 [shape = 'u8[4096]{0}', space=vmem, size = 0x1000, scoped, tag = 'output window, operand 0, single buffered']
    %9 = vsyncpa [#allocation3], 0
    %10 = vsyncpa [#allocation8], 0
    %11 = vsyncpa [#allocation5], 0
    %12 = vsyncpa [#allocation6], 0
    %13 = vsyncpa [#allocation4], 0
    // Predicated region
    $region2: #{tpu_custom_call.1} parent=1 // pred_check
      _
    $region3: #{tpu_custom_call.1} parent=1 // pred_check_branch
      %15 = sbr.rel (0) target = $region5
    $region4: #{tpu_custom_call.1} parent=1 // pred_region
      %17 = vsyncadd [#allocation3], 0
      %s19 = sshll.u32 %s0, 4
      %s20 = int_to_ptr.hbm [resolvable:$true] %s19
      %s21 = sshll.u32 [#allocation2], 4
      %s22 = int_to_ptr.vmem [resolvable:$true] %s21
      %24 = dma.hbm_to_vmem [thread:$0]  %s20, 1024, %s22, [#allocation3]
    $region5: #{tpu_custom_call.1} parent=1 // pred_fallthru
      _
    // Predicated region
    $region6: #{tpu_custom_call.1} parent=1 // pred_check
      _
    $region7: #{tpu_custom_call.1} parent=1 // pred_check_branch
      %26 = sbr.rel (0) target = $region9
    $region8: #{tpu_custom_call.1} parent=1 // pred_region
      %28 = vsyncadd [#allocation8], 0
      %s30 = sshll.u32 %s1, 4
      %s31 = int_to_ptr.hbm [resolvable:$true] %s30
      %s32 = sshll.u32 [#allocation7], 4
      %s33 = int_to_ptr.vmem [resolvable:$true] %s32
      %35 = dma.hbm_to_vmem [thread:$0]  %s31, 1024, %s33, [#allocation8]
    $region9: #{tpu_custom_call.1} parent=1 // pred_fallthru
      _
    // Predicated region
    $region10: #{tpu_custom_call.1} parent=1 // pred_check
      _
    $region11: #{tpu_custom_call.1} parent=1 // pred_check_branch
      %37 = sbr.rel (0) target = $region13
    $region12: #{tpu_custom_call.1} parent=1 // pred_region
      %39 = vsyncadd [#allocation5], 0
      %s41 = sshll.u32 %s2, 4
      %s42 = int_to_ptr.hbm [resolvable:$true] %s41
      %44 = dma.hbm_to_smem %s42, 64, [#allocation9], [#allocation5]
    $region13: #{tpu_custom_call.1} parent=1 // pred_fallthru
      _
    // Predicated region
    $region14: #{tpu_custom_call.1} parent=1 // pred_check
      _
    $region15: #{tpu_custom_call.1} parent=1 // pred_check_branch
      %46 = sbr.rel (0) target = $region17
    $region16: #{tpu_custom_call.1} parent=1 // pred_region
      %48 = vsyncadd [#allocation6], 0
      %s50 = sshll.u32 %s3, 4
      %s51 = int_to_ptr.vmem [resolvable:$true] %s50
      %53 = dma.vmem_to_smem %s51, 16, [#allocation10], [#allocation6]
    $region17: #{tpu_custom_call.1} parent=1 // pred_fallthru
      _
    // Predicated region
    $region18: #{tpu_custom_call.1} parent=1 // pred_check
      _
    $region19: #{tpu_custom_call.1} parent=1 // pred_check_branch
      %55 = sbr.rel (0) target = $region21
    $region20: #{tpu_custom_call.1} parent=1 // pred_region
      %57 = dma.done [#allocation3], 1024
    $region21: #{tpu_custom_call.1} parent=1 // pred_fallthru
      _
    // Predicated region
    $region22: #{tpu_custom_call.1} parent=1 // pred_check
      _
    $region23: #{tpu_custom_call.1} parent=1 // pred_check_branch
      %59 = sbr.rel (0) target = $region25
    $region24: #{tpu_custom_call.1} parent=1 // pred_region
      %61 = dma.done [#allocation8], 1024
    $region25: #{tpu_custom_call.1} parent=1 // pred_fallthru
      _
    // Predicated region
    $region26: #{tpu_custom_call.1} parent=1 // pred_check
      _
    $region27: #{tpu_custom_call.1} parent=1 // pred_check_branch
      %63 = sbr.rel (0) target = $region29
    $region28: #{tpu_custom_call.1} parent=1 // pred_region
      %65 = dma.done [#allocation5], 64
    $region29: #{tpu_custom_call.1} parent=1 // pred_fallthru
      _
    // Predicated region
    $region30: #{tpu_custom_call.1} parent=1 // pred_check
      _
    $region31: #{tpu_custom_call.1} parent=1 // pred_check_branch
      %67 = sbr.rel (0) target = $region33
    $region32: #{tpu_custom_call.1} parent=1 // pred_region
      %69 = dma.done [#allocation6], 16
    $region33: #{tpu_custom_call.1} parent=1 // pred_fallthru
      _
    %70 = sfence
    %s71 = sld [smem:[#allocation9]]
    %s72 = sld [smem:[#allocation9 + $0x1]]
    %s73 = sld [smem:[#allocation9 + $0x2]]
    %s74 = sld [smem:[#allocation9 + $0x3]]
    %s75 = sld [smem:[#allocation9 + $0x80]]
    %s76 = sld [smem:[#allocation9 + $0x81]]
    %s77 = sld [smem:[#allocation9 + $0x82]]
    %s78 = sld [smem:[#allocation9 + $0x83]]
    %s79 = sld [smem:[#allocation9 + $0x100]]
    %s80 = sld [smem:[#allocation9 + $0x101]]
    %s81 = sld [smem:[#allocation9 + $0x102]]
    %s82 = sld [smem:[#allocation9 + $0x103]]
    %s83 = sld [smem:[#allocation9 + $0x180]]
    %s84 = sld [smem:[#allocation9 + $0x181]]
    %s85 = sld [smem:[#allocation9 + $0x182]]
    %s86 = sld [smem:[#allocation9 + $0x183]]
    %s87 = sld [smem:[#allocation10]]
    %s88 = sld [smem:[#allocation10 + $0x1]]
    %s89 = sld [smem:[#allocation10 + $0x2]]
    %s90 = sld [smem:[#allocation10 + $0x3]]
    %v91 = vld [vmem:[#allocation2] sm:$0xff]
    %v92 = vld [vmem:[#allocation2 + $0x8] sm:$0xff]
    %v93 = vld [vmem:[#allocation2 + $0x10] sm:$0xff]
    %v94 = vld [vmem:[#allocation2 + $0x18] sm:$0xff]
    %v95 = vld [vmem:[#allocation2 + $0x20] sm:$0xff]
    %v96 = vld [vmem:[#allocation2 + $0x28] sm:$0xff]
    %v97 = vld [vmem:[#allocation2 + $0x30] sm:$0xff]
    %v98 = vld [vmem:[#allocation2 + $0x38] sm:$0xff]
    %v99 = vstv %s71
    %v100 = vmul.f32 %v91, %v99
    %v101 = vmul.f32 %v92, %v99
    %v102 = vstv %s72
    %v103 = vmul.f32 %v93, %v102
    %v104 = vmul.f32 %v94, %v102
    %v105 = vadd.f32 %v100, %v103
    %v106 = vadd.f32 %v101, %v104
    %v107 = vstv %s73
    %v108 = vmul.f32 %v95, %v107
    %v109 = vmul.f32 %v96, %v107
    %v110 = vadd.f32 %v105, %v108
    %v111 = vadd.f32 %v106, %v109
    %v112 = vstv %s74
    %v113 = vmul.f32 %v97, %v112
    %v114 = vmul.f32 %v98, %v112
    %v115 = vadd.f32 %v110, %v113
    %v116 = vadd.f32 %v111, %v114
    %v117 = vstv %s87
    %v118 = vadd.f32 %v115, %v117
    %v119 = vadd.f32 %v116, %v117
    %v120 = vstv %s75
    %v121 = vmul.f32 %v91, %v120
    %v122 = vmul.f32 %v92, %v120
    %v123 = vstv %s76
    %v124 = vmul.f32 %v93, %v123
    %v125 = vmul.f32 %v94, %v123
    %v126 = vadd.f32 %v121, %v124
    %v127 = vadd.f32 %v122, %v125
    %v128 = vstv %s77
    %v129 = vmul.f32 %v95, %v128
    %v130 = vmul.f32 %v96, %v128
    %v131 = vadd.f32 %v126, %v129
    %v132 = vadd.f32 %v127, %v130
    %v133 = vstv %s78
    %v134 = vmul.f32 %v97, %v133
    %v135 = vmul.f32 %v98, %v133
    %v136 = vadd.f32 %v131, %v134
    %v137 = vadd.f32 %v132, %v135
    %v138 = vstv %s88
    %v139 = vadd.f32 %v136, %v138
    %v140 = vadd.f32 %v137, %v138
    %v141 = vstv %s79
    %v142 = vmul.f32 %v91, %v141
    %v143 = vmul.f32 %v92, %v141
    %v144 = vstv %s80
    %v145 = vmul.f32 %v93, %v144
    %v146 = vmul.f32 %v94, %v144
    %v147 = vadd.f32 %v142, %v145
    %v148 = vadd.f32 %v143, %v146
    %v149 = vstv %s81
    %v150 = vmul.f32 %v95, %v149
    %v151 = vmul.f32 %v96, %v149
    %v152 = vadd.f32 %v147, %v150
    %v153 = vadd.f32 %v148, %v151
    %v154 = vstv %s82
    %v155 = vmul.f32 %v97, %v154
    %v156 = vmul.f32 %v98, %v154
    %v157 = vadd.f32 %v152, %v155
    %v158 = vadd.f32 %v153, %v156
    %v159 = vstv %s89
    %v160 = vadd.f32 %v157, %v159
    %v161 = vadd.f32 %v158, %v159
    %v162 = vstv %s83
    %v163 = vmul.f32 %v91, %v162
    %v164 = vmul.f32 %v92, %v162
    %v165 = vstv %s84
    %v166 = vmul.f32 %v93, %v165
    %v167 = vmul.f32 %v94, %v165
    %v168 = vadd.f32 %v163, %v166
    %v169 = vadd.f32 %v164, %v167
    %v170 = vstv %s85
    %v171 = vmul.f32 %v95, %v170
    %v172 = vmul.f32 %v96, %v170
    %v173 = vadd.f32 %v168, %v171
    %v174 = vadd.f32 %v169, %v172
    %v175 = vstv %s86
    %v176 = vmul.f32 %v97, %v175
    %v177 = vmul.f32 %v98, %v175
    %v178 = vadd.f32 %v173, %v176
    %v179 = vadd.f32 %v174, %v177
    %v180 = vstv %s90
    %v181 = vadd.f32 %v178, %v180
    %v182 = vadd.f32 %v179, %v180
    %v183 = vxor.u32 %v118, 2147483648
    %v184 = vxor.u32 %v119, 2147483648
    %v185 = vmul.f32 %v183, 1.442695
    %v186 = vpow.pop %v185
    %v187 = vmul.f32 %v184, 1.442695
    %v188 = vpow.pop %v187
    %v189 = vadd.f32 %v186, 1.0
    %v190 = vadd.f32 %v188, 1.0
    %v191 = vrcp.pop %v189
    %v192 = vmul.f32 %v189, %v191
    %v193 = vsub.f32 1.0, %v192
    %v194 = vmul.f32 %v191, %v193
    %v195 = vadd.f32 %v191, %v194
    %vm196 = vweird.f32 %v189
    %vm197 = vweird.f32 %v191
    %vm198 = vmor %vm196, %vm197
    %v199 = vsel %vm198, %v191, %v195
    %v200 = vand.u32 2147483647, %v189
    %vm201 = vcmp.eq.f32.partialorder %v200, 8.507059e+37
    %v202 = vand.u32 %v189, 2147483648
    %v203 = vor.u32 1.1754944e-38, %v202
    %v204 = vsel %vm201, %v203, %v199
    %v205 = vmul.f32 1.0, %v204
    %v206 = vrcp.pop %v190
    %v207 = vmul.f32 %v190, %v206
    %v208 = vsub.f32 1.0, %v207
    %v209 = vmul.f32 %v206, %v208
    %v210 = vadd.f32 %v206, %v209
    %vm211 = vweird.f32 %v190
    %vm212 = vweird.f32 %v206
    %vm213 = vmor %vm211, %vm212
    %v214 = vsel %vm213, %v206, %v210
    %v215 = vand.u32 2147483647, %v190
    %vm216 = vcmp.eq.f32.partialorder %v215, 8.507059e+37
    %v217 = vand.u32 %v190, 2147483648
    %v218 = vor.u32 1.1754944e-38, %v217
    %v219 = vsel %vm216, %v218, %v214
    %v220 = vmul.f32 1.0, %v219
    %v221 = vxor.u32 %v139, 2147483648
    %v222 = vxor.u32 %v140, 2147483648
    %v223 = vmul.f32 %v221, 1.442695
    %v224 = vpow.pop %v223
    %v225 = vmul.f32 %v222, 1.442695
    %v226 = vpow.pop %v225
    %v227 = vadd.f32 %v224, 1.0
    %v228 = vadd.f32 %v226, 1.0
    %v229 = vrcp.pop %v227
    %v230 = vmul.f32 %v227, %v229
    %v231 = vsub.f32 1.0, %v230
    %v232 = vmul.f32 %v229, %v231
    %v233 = vadd.f32 %v229, %v232
    %vm234 = vweird.f32 %v227
    %vm235 = vweird.f32 %v229
    %vm236 = vmor %vm234, %vm235
    %v237 = vsel %vm236, %v229, %v233
    %v238 = vand.u32 2147483647, %v227
    %vm239 = vcmp.eq.f32.partialorder %v238, 8.507059e+37
    %v240 = vand.u32 %v227, 2147483648
    %v241 = vor.u32 1.1754944e-38, %v240
    %v242 = vsel %vm239, %v241, %v237
    %v243 = vmul.f32 1.0, %v242
    %v244 = vrcp.pop %v228
    %v245 = vmul.f32 %v228, %v244
    %v246 = vsub.f32 1.0, %v245
    %v247 = vmul.f32 %v244, %v246
    %v248 = vadd.f32 %v244, %v247
    %vm249 = vweird.f32 %v228
    %vm250 = vweird.f32 %v244
    %vm251 = vmor %vm249, %vm250
    %v252 = vsel %vm251, %v244, %v248
    %v253 = vand.u32 2147483647, %v228
    %vm254 = vcmp.eq.f32.partialorder %v253, 8.507059e+37
    %v255 = vand.u32 %v228, 2147483648
    %v256 = vor.u32 1.1754944e-38, %v255
    %v257 = vsel %vm254, %v256, %v252
    %v258 = vmul.f32 1.0, %v257
    %v259 = vxor.u32 %v160, 2147483648
    %v260 = vxor.u32 %v161, 2147483648
    %v261 = vmul.f32 %v259, 1.442695
    %v262 = vpow.pop %v261
    %v263 = vmul.f32 %v260, 1.442695
    %v264 = vpow.pop %v263
    %v265 = vadd.f32 %v262, 1.0
    %v266 = vadd.f32 %v264, 1.0
    %v267 = vrcp.pop %v265
    %v268 = vmul.f32 %v265, %v267
    %v269 = vsub.f32 1.0, %v268
    %v270 = vmul.f32 %v267, %v269
    %v271 = vadd.f32 %v267, %v270
    %vm272 = vweird.f32 %v265
    %vm273 = vweird.f32 %v267
    %vm274 = vmor %vm272, %vm273
    %v275 = vsel %vm274, %v267, %v271
    %v276 = vand.u32 2147483647, %v265
    %vm277 = vcmp.eq.f32.partialorder %v276, 8.507059e+37
    %v278 = vand.u32 %v265, 2147483648
    %v279 = vor.u32 1.1754944e-38, %v278
    %v280 = vsel %vm277, %v279, %v275
    %v281 = vmul.f32 1.0, %v280
    %v282 = vrcp.pop %v266
    %v283 = vmul.f32 %v266, %v282
    %v284 = vsub.f32 1.0, %v283
    %v285 = vmul.f32 %v282, %v284
    %v286 = vadd.f32 %v282, %v285
    %vm287 = vweird.f32 %v266
    %vm288 = vweird.f32 %v282
    %vm289 = vmor %vm287, %vm288
    %v290 = vsel %vm289, %v282, %v286
    %v291 = vand.u32 2147483647, %v266
    %vm292 = vcmp.eq.f32.partialorder %v291, 8.507059e+37
    %v293 = vand.u32 %v266, 2147483648
    %v294 = vor.u32 1.1754944e-38, %v293
    %v295 = vsel %vm292, %v294, %v290
    %v296 = vmul.f32 1.0, %v295
    %v297 = vxor.u32 %v181, 2147483648
    %v298 = vxor.u32 %v182, 2147483648
    %v299 = vmul.f32 %v297, 1.442695
    %v300 = vpow.pop %v299
    %v301 = vmul.f32 %v298, 1.442695
    %v302 = vpow.pop %v301
    %v303 = vadd.f32 %v300, 1.0
    %v304 = vadd.f32 %v302, 1.0
    %v305 = vrcp.pop %v303
    %v306 = vmul.f32 %v303, %v305
    %v307 = vsub.f32 1.0, %v306
    %v308 = vmul.f32 %v305, %v307
    %v309 = vadd.f32 %v305, %v308
    %vm310 = vweird.f32 %v303
    %vm311 = vweird.f32 %v305
    %vm312 = vmor %vm310, %vm311
    %v313 = vsel %vm312, %v305, %v309
    %v314 = vand.u32 2147483647, %v303
    %vm315 = vcmp.eq.f32.partialorder %v314, 8.507059e+37
    %v316 = vand.u32 %v303, 2147483648
    %v317 = vor.u32 1.1754944e-38, %v316
    %v318 = vsel %vm315, %v317, %v313
    %v319 = vmul.f32 1.0, %v318
    %v320 = vrcp.pop %v304
    %v321 = vmul.f32 %v304, %v320
    %v322 = vsub.f32 1.0, %v321
    %v323 = vmul.f32 %v320, %v322
    %v324 = vadd.f32 %v320, %v323
    %vm325 = vweird.f32 %v304
    %vm326 = vweird.f32 %v320
    %vm327 = vmor %vm325, %vm326
    %v328 = vsel %vm327, %v320, %v324
    %v329 = vand.u32 2147483647, %v304
    %vm330 = vcmp.eq.f32.partialorder %v329, 8.507059e+37
    %v331 = vand.u32 %v304, 2147483648
    %v332 = vor.u32 1.1754944e-38, %v331
    %v333 = vsel %vm330, %v332, %v328
    %v334 = vmul.f32 1.0, %v333
    %v335 = vld [vmem:[#allocation7] sm:$0xff]
    %v336 = vld [vmem:[#allocation7 + $0x8] sm:$0xff]
    %v337 = vld [vmem:[#allocation7 + $0x10] sm:$0xff]
    %v338 = vld [vmem:[#allocation7 + $0x18] sm:$0xff]
    %v339 = vld [vmem:[#allocation7 + $0x20] sm:$0xff]
    %v340 = vld [vmem:[#allocation7 + $0x28] sm:$0xff]
    %v341 = vld [vmem:[#allocation7 + $0x30] sm:$0xff]
    %v342 = vld [vmem:[#allocation7 + $0x38] sm:$0xff]
    %v343 = vmul.f32 %v335, %v335
    %v344 = vmul.f32 %v336, %v336
    %v345 = vadd.f32 %v343, %v344
    %346 = vadd.xlane.f32.xlu0 %v345
    %v347 = vpop.xlane.xlu0 %346
    %v348 = vmul.f32 %v337, %v337
    %v349 = vmul.f32 %v338, %v338
    %v350 = vadd.f32 %v348, %v349
    %351 = vadd.xlane.f32.xlu0 %v350
    %v352 = vpop.xlane.xlu0 %351
    %v353 = vadd.f32 %v347, %v352
    %v354 = vmul.f32 %v339, %v339
    %v355 = vmul.f32 %v340, %v340
    %v356 = vadd.f32 %v354, %v355
    %357 = vadd.xlane.f32.xlu0 %v356
    %v358 = vpop.xlane.xlu0 %357
    %v359 = vadd.f32 %v353, %v358
    %v360 = vmul.f32 %v341, %v341
    %v361 = vmul.f32 %v342, %v342
    %v362 = vadd.f32 %v360, %v361
    %363 = vadd.xlane.f32.xlu0 %v362
    %v364 = vpop.xlane.xlu0 %363
    %v365 = vadd.f32 %v359, %v364
    %v366 = vrsqrt.pop %v365
    %v367 = vmul.f32 %v366, %v365
    %v368 = vmul.f32 %v367, %v366
    %v369 = vmul.f32 0.5, %v368
    %v370 = vsub.f32 1.5, %v369
    %v371 = vmul.f32 %v366, %v370
    %v372 = vmul.f32 %v365, %v371
    %vm373 = vcmp.eq.f32.partialorder %v365, inf
    %v374 = vsel %vm373, %v365, %v372
    %vm375 = vcmp.eq.f32.partialorder %v365, 0.0
    %v376 = vand.u32 %v365, 2147483648
    %v377 = vsel %vm375, %v376, %v374
    %v378 = vadd.f32 %v377, 1e-08
    %v379 = vrcp.pop %v378
    %v380 = vmul.f32 %v378, %v379
    %v381 = vsub.f32 1.0, %v380
    %v382 = vmul.f32 %v379, %v381
    %v383 = vadd.f32 %v379, %v382
    %vm384 = vweird.f32 %v378
    %vm385 = vweird.f32 %v379
    %vm386 = vmor %vm384, %vm385
    %v387 = vsel %vm386, %v379, %v383
    %v388 = vand.u32 2147483647, %v378
    %vm389 = vcmp.eq.f32.partialorder %v388, 8.507059e+37
    %v390 = vand.u32 %v378, 2147483648
    %v391 = vor.u32 1.1754944e-38, %v390
    %v392 = vsel %vm389, %v391, %v387
    %v393 = vmul.f32 1.0, %v392
    %v394 = vmul.f32 %v335, %v393
    %v395 = vmul.f32 %v336, %v393
    %v396 = vmul.f32 %v337, %v393
    %v397 = vmul.f32 %v338, %v393
    %v398 = vmul.f32 %v339, %v393
    %v399 = vmul.f32 %v340, %v393
    %v400 = vmul.f32 %v341, %v393
    %v401 = vmul.f32 %v342, %v393
    %v402 = vmul.f32 %v394, %v99
    %v403 = vmul.f32 %v395, %v99
    %v404 = vmul.f32 %v396, %v102
    %v405 = vmul.f32 %v397, %v102
    %v406 = vadd.f32 %v402, %v404
    %v407 = vadd.f32 %v403, %v405
    %v408 = vmul.f32 %v398, %v107
    %v409 = vmul.f32 %v399, %v107
    %v410 = vadd.f32 %v406, %v408
    %v411 = vadd.f32 %v407, %v409
    %v412 = vmul.f32 %v400, %v112
    %v413 = vmul.f32 %v401, %v112
    %v414 = vadd.f32 %v410, %v412
    %v415 = vadd.f32 %v411, %v413
    %v416 = vmul.f32 %v414, 0.019607844
    %v417 = vmul.f32 %v415, 0.019607844
    %v418 = vadd.f32 %v118, %v416
    %v419 = vadd.f32 %v119, %v417
    %v420 = vxor.u32 %v418, 2147483648
    %v421 = vxor.u32 %v419, 2147483648
    %v422 = vmul.f32 %v420, 1.442695
    %v423 = vpow.pop %v422
    %v424 = vmul.f32 %v421, 1.442695
    %v425 = vpow.pop %v424
    %v426 = vadd.f32 %v423, 1.0
    %v427 = vadd.f32 %v425, 1.0
    %v428 = vrcp.pop %v426
    %v429 = vmul.f32 %v426, %v428
    %v430 = vsub.f32 1.0, %v429
    %v431 = vmul.f32 %v428, %v430
    %v432 = vadd.f32 %v428, %v431
    %vm433 = vweird.f32 %v426
    %vm434 = vweird.f32 %v428
    %vm435 = vmor %vm433, %vm434
    %v436 = vsel %vm435, %v428, %v432
    %v437 = vand.u32 2147483647, %v426
    %vm438 = vcmp.eq.f32.partialorder %v437, 8.507059e+37
    %v439 = vand.u32 %v426, 2147483648
    %v440 = vor.u32 1.1754944e-38, %v439
    %v441 = vsel %vm438, %v440, %v436
    %v442 = vmul.f32 1.0, %v441
    %v443 = vrcp.pop %v427
    %v444 = vmul.f32 %v427, %v443
    %v445 = vsub.f32 1.0, %v444
    %v446 = vmul.f32 %v443, %v445
    %v447 = vadd.f32 %v443, %v446
    %vm448 = vweird.f32 %v427
    %vm449 = vweird.f32 %v443
    %vm450 = vmor %vm448, %vm449
    %v451 = vsel %vm450, %v443, %v447
    %v452 = vand.u32 2147483647, %v427
    %vm453 = vcmp.eq.f32.partialorder %v452, 8.507059e+37
    %v454 = vand.u32 %v427, 2147483648
    %v455 = vor.u32 1.1754944e-38, %v454
    %v456 = vsel %vm453, %v455, %v451
    %v457 = vmul.f32 1.0, %v456
    %v458 = vsub.f32 %v442, %v205
    %v459 = vsub.f32 %v457, %v220
    %v460 = vmul.f32 %v458, %v99
    %v461 = vmul.f32 %v459, %v99
    %v462 = vmul.f32 %v458, %v102
    %v463 = vmul.f32 %v459, %v102
    %v464 = vmul.f32 %v458, %v107
    %v465 = vmul.f32 %v459, %v107
    %v466 = vmul.f32 %v458, %v112
    %v467 = vmul.f32 %v459, %v112
    %v468 = vmul.f32 %v394, %v120
    %v469 = vmul.f32 %v395, %v120
    %v470 = vmul.f32 %v396, %v123
    %v471 = vmul.f32 %v397, %v123
    %v472 = vadd.f32 %v468, %v470
    %v473 = vadd.f32 %v469, %v471
    %v474 = vmul.f32 %v398, %v128
    %v475 = vmul.f32 %v399, %v128
    %v476 = vadd.f32 %v472, %v474
    %v477 = vadd.f32 %v473, %v475
    %v478 = vmul.f32 %v400, %v133
    %v479 = vmul.f32 %v401, %v133
    %v480 = vadd.f32 %v476, %v478
    %v481 = vadd.f32 %v477, %v479
    %v482 = vmul.f32 %v480, 0.019607844
    %v483 = vmul.f32 %v481, 0.019607844
    %v484 = vadd.f32 %v139, %v482
    %v485 = vadd.f32 %v140, %v483
    %v486 = vxor.u32 %v484, 2147483648
    %v487 = vxor.u32 %v485, 2147483648
    %v488 = vmul.f32 %v486, 1.442695
    %v489 = vpow.pop %v488
    %v490 = vmul.f32 %v487, 1.442695
    %v491 = vpow.pop %v490
    %v492 = vadd.f32 %v489, 1.0
    %v493 = vadd.f32 %v491, 1.0
    %v494 = vrcp.pop %v492
    %v495 = vmul.f32 %v492, %v494
    %v496 = vsub.f32 1.0, %v495
    %v497 = vmul.f32 %v494, %v496
    %v498 = vadd.f32 %v494, %v497
    %vm499 = vweird.f32 %v492
    %vm500 = vweird.f32 %v494
    %vm501 = vmor %vm499, %vm500
    %v502 = vsel %vm501, %v494, %v498
    %v503 = vand.u32 2147483647, %v492
    %vm504 = vcmp.eq.f32.partialorder %v503, 8.507059e+37
    %v505 = vand.u32 %v492, 2147483648
    %v506 = vor.u32 1.1754944e-38, %v505
    %v507 = vsel %vm504, %v506, %v502
    %v508 = vmul.f32 1.0, %v507
    %v509 = vrcp.pop %v493
    %v510 = vmul.f32 %v493, %v509
    %v511 = vsub.f32 1.0, %v510
    %v512 = vmul.f32 %v509, %v511
    %v513 = vadd.f32 %v509, %v512
    %vm514 = vweird.f32 %v493
    %vm515 = vweird.f32 %v509
    %vm516 = vmor %vm514, %vm515
    %v517 = vsel %vm516, %v509, %v513
    %v518 = vand.u32 2147483647, %v493
    %vm519 = vcmp.eq.f32.partialorder %v518, 8.507059e+37
    %v520 = vand.u32 %v493, 2147483648
    %v521 = vor.u32 1.1754944e-38, %v520
    %v522 = vsel %vm519, %v521, %v517
    %v523 = vmul.f32 1.0, %v522
    %v524 = vsub.f32 %v508, %v243
    %v525 = vsub.f32 %v523, %v258
    %v526 = vmul.f32 %v524, %v120
    %v527 = vmul.f32 %v525, %v120
    %v528 = vadd.f32 %v460, %v526
    %v529 = vadd.f32 %v461, %v527
    %v530 = vmul.f32 %v524, %v123
    %v531 = vmul.f32 %v525, %v123
    %v532 = vadd.f32 %v462, %v530
    %v533 = vadd.f32 %v463, %v531
    %v534 = vmul.f32 %v524, %v128
    %v535 = vmul.f32 %v525, %v128
    %v536 = vadd.f32 %v464, %v534
    %v537 = vadd.f32 %v465, %v535
    %v538 = vmul.f32 %v524, %v133
    %v539 = vmul.f32 %v525, %v133
    %v540 = vadd.f32 %v466, %v538
    %v541 = vadd.f32 %v467, %v539
    %v542 = vmul.f32 %v394, %v141
    %v543 = vmul.f32 %v395, %v141
    %v544 = vmul.f32 %v396, %v144
    %v545 = vmul.f32 %v397, %v144
    %v546 = vadd.f32 %v542, %v544
    %v547 = vadd.f32 %v543, %v545
    %v548 = vmul.f32 %v398, %v149
    %v549 = vmul.f32 %v399, %v149
    %v550 = vadd.f32 %v546, %v548
    %v551 = vadd.f32 %v547, %v549
    %v552 = vmul.f32 %v400, %v154
    %v553 = vmul.f32 %v401, %v154
    %v554 = vadd.f32 %v550, %v552
    %v555 = vadd.f32 %v551, %v553
    %v556 = vmul.f32 %v554, 0.019607844
    %v557 = vmul.f32 %v555, 0.019607844
    %v558 = vadd.f32 %v160, %v556
    %v559 = vadd.f32 %v161, %v557
    %v560 = vxor.u32 %v558, 2147483648
    %v561 = vxor.u32 %v559, 2147483648
    %v562 = vmul.f32 %v560, 1.442695
    %v563 = vpow.pop %v562
    %v564 = vmul.f32 %v561, 1.442695
    %v565 = vpow.pop %v564
    %v566 = vadd.f32 %v563, 1.0
    %v567 = vadd.f32 %v565, 1.0
    %v568 = vrcp.pop %v566
    %v569 = vmul.f32 %v566, %v568
    %v570 = vsub.f32 1.0, %v569
    %v571 = vmul.f32 %v568, %v570
    %v572 = vadd.f32 %v568, %v571
    %vm573 = vweird.f32 %v566
    %vm574 = vweird.f32 %v568
    %vm575 = vmor %vm573, %vm574
    %v576 = vsel %vm575, %v568, %v572
    %v577 = vand.u32 2147483647, %v566
    %vm578 = vcmp.eq.f32.partialorder %v577, 8.507059e+37
    %v579 = vand.u32 %v566, 2147483648
    %v580 = vor.u32 1.1754944e-38, %v579
    %v581 = vsel %vm578, %v580, %v576
    %v582 = vmul.f32 1.0, %v581
    %v583 = vrcp.pop %v567
    %v584 = vmul.f32 %v567, %v583
    %v585 = vsub.f32 1.0, %v584
    %v586 = vmul.f32 %v583, %v585
    %v587 = vadd.f32 %v583, %v586
    %vm588 = vweird.f32 %v567
    %vm589 = vweird.f32 %v583
    %vm590 = vmor %vm588, %vm589
    %v591 = vsel %vm590, %v583, %v587
    %v592 = vand.u32 2147483647, %v567
    %vm593 = vcmp.eq.f32.partialorder %v592, 8.507059e+37
    %v594 = vand.u32 %v567, 2147483648
    %v595 = vor.u32 1.1754944e-38, %v594
    %v596 = vsel %vm593, %v595, %v591
    %v597 = vmul.f32 1.0, %v596
    %v598 = vsub.f32 %v582, %v281
    %v599 = vsub.f32 %v597, %v296
    %v600 = vmul.f32 %v598, %v141
    %v601 = vmul.f32 %v599, %v141
    %v602 = vadd.f32 %v528, %v600
    %v603 = vadd.f32 %v529, %v601
    %v604 = vmul.f32 %v598, %v144
    %v605 = vmul.f32 %v599, %v144
    %v606 = vadd.f32 %v532, %v604
    %v607 = vadd.f32 %v533, %v605
    %v608 = vmul.f32 %v598, %v149
    %v609 = vmul.f32 %v599, %v149
    %v610 = vadd.f32 %v536, %v608
    %v611 = vadd.f32 %v537, %v609
    %v612 = vmul.f32 %v598, %v154
    %v613 = vmul.f32 %v599, %v154
    %v614 = vadd.f32 %v540, %v612
    %v615 = vadd.f32 %v541, %v613
    %v616 = vmul.f32 %v394, %v162
    %v617 = vmul.f32 %v395, %v162
    %v618 = vmul.f32 %v396, %v165
    %v619 = vmul.f32 %v397, %v165
    %v620 = vadd.f32 %v616, %v618
    %v621 = vadd.f32 %v617, %v619
    %v622 = vmul.f32 %v398, %v170
    %v623 = vmul.f32 %v399, %v170
    %v624 = vadd.f32 %v620, %v622
    %v625 = vadd.f32 %v621, %v623
    %v626 = vmul.f32 %v400, %v175
    %v627 = vmul.f32 %v401, %v175
    %v628 = vadd.f32 %v624, %v626
    %v629 = vadd.f32 %v625, %v627
    %v630 = vmul.f32 %v628, 0.019607844
    %v631 = vmul.f32 %v629, 0.019607844
    %v632 = vadd.f32 %v181, %v630
    %v633 = vadd.f32 %v182, %v631
    %v634 = vxor.u32 %v632, 2147483648
    %v635 = vxor.u32 %v633, 2147483648
    %v636 = vmul.f32 %v634, 1.442695
    %v637 = vpow.pop %v636
    %v638 = vmul.f32 %v635, 1.442695
    %v639 = vpow.pop %v638
    %v640 = vadd.f32 %v637, 1.0
    %v641 = vadd.f32 %v639, 1.0
    %v642 = vrcp.pop %v640
    %v643 = vmul.f32 %v640, %v642
    %v644 = vsub.f32 1.0, %v643
    %v645 = vmul.f32 %v642, %v644
    %v646 = vadd.f32 %v642, %v645
    %vm647 = vweird.f32 %v640
    %vm648 = vweird.f32 %v642
    %vm649 = vmor %vm647, %vm648
    %v650 = vsel %vm649, %v642, %v646
    %v651 = vand.u32 2147483647, %v640
    %vm652 = vcmp.eq.f32.partialorder %v651, 8.507059e+37
    %v653 = vand.u32 %v640, 2147483648
    %v654 = vor.u32 1.1754944e-38, %v653
    %v655 = vsel %vm652, %v654, %v650
    %v656 = vmul.f32 1.0, %v655
    %v657 = vrcp.pop %v641
    %v658 = vmul.f32 %v641, %v657
    %v659 = vsub.f32 1.0, %v658
    %v660 = vmul.f32 %v657, %v659
    %v661 = vadd.f32 %v657, %v660
    %vm662 = vweird.f32 %v641
    %vm663 = vweird.f32 %v657
    %vm664 = vmor %vm662, %vm663
    %v665 = vsel %vm664, %v657, %v661
    %v666 = vand.u32 2147483647, %v641
    %vm667 = vcmp.eq.f32.partialorder %v666, 8.507059e+37
    %v668 = vand.u32 %v641, 2147483648
    %v669 = vor.u32 1.1754944e-38, %v668
    %v670 = vsel %vm667, %v669, %v665
    %v671 = vmul.f32 1.0, %v670
    %v672 = vsub.f32 %v656, %v319
    %v673 = vsub.f32 %v671, %v334
    %v674 = vmul.f32 %v672, %v162
    %v675 = vmul.f32 %v673, %v162
    %v676 = vadd.f32 %v602, %v674
    %v677 = vadd.f32 %v603, %v675
    %v678 = vmul.f32 %v672, %v165
    %v679 = vmul.f32 %v673, %v165
    %v680 = vadd.f32 %v606, %v678
    %v681 = vadd.f32 %v607, %v679
    %v682 = vmul.f32 %v672, %v170
    %v683 = vmul.f32 %v673, %v170
    %v684 = vadd.f32 %v610, %v682
    %v685 = vadd.f32 %v611, %v683
    %v686 = vmul.f32 %v672, %v175
    %v687 = vmul.f32 %v673, %v175
    %v688 = vadd.f32 %v614, %v686
    %v689 = vadd.f32 %v615, %v687
    %v690 = vmul.f32 %v676, %v676
    %v691 = vmul.f32 %v677, %v677
    %v692 = vadd.f32 %v690, %v691
    %693 = vadd.xlane.f32.xlu0 %v692
    %v694 = vpop.xlane.xlu0 %693
    %v695 = vmul.f32 %v680, %v680
    %v696 = vmul.f32 %v681, %v681
    %v697 = vadd.f32 %v695, %v696
    %698 = vadd.xlane.f32.xlu0 %v697
    %v699 = vpop.xlane.xlu0 %698
    %v700 = vadd.f32 %v694, %v699
    %v701 = vmul.f32 %v684, %v684
    %v702 = vmul.f32 %v685, %v685
    %v703 = vadd.f32 %v701, %v702
    %704 = vadd.xlane.f32.xlu0 %v703
    %v705 = vpop.xlane.xlu0 %704
    %v706 = vadd.f32 %v700, %v705
    %v707 = vmul.f32 %v688, %v688
    %v708 = vmul.f32 %v689, %v689
    %v709 = vadd.f32 %v707, %v708
    %710 = vadd.xlane.f32.xlu0 %v709
    %v711 = vpop.xlane.xlu0 %710
    %v712 = vadd.f32 %v706, %v711
    %v713 = vrsqrt.pop %v712
    %v714 = vmul.f32 %v713, %v712
    %v715 = vmul.f32 %v714, %v713
    %v716 = vmul.f32 0.5, %v715
    %v717 = vsub.f32 1.5, %v716
    %v718 = vmul.f32 %v713, %v717
    %v719 = vmul.f32 %v712, %v718
    %vm720 = vcmp.eq.f32.partialorder %v712, inf
    %v721 = vsel %vm720, %v712, %v719
    %vm722 = vcmp.eq.f32.partialorder %v712, 0.0
    %v723 = vand.u32 %v712, 2147483648
    %v724 = vsel %vm722, %v723, %v721
    %v725 = vadd.f32 %v724, 1e-08
    %v726 = vrcp.pop %v725
    %v727 = vmul.f32 %v725, %v726
    %v728 = vsub.f32 1.0, %v727
    %v729 = vmul.f32 %v726, %v728
    %v730 = vadd.f32 %v726, %v729
    %vm731 = vweird.f32 %v725
    %vm732 = vweird.f32 %v726
    %vm733 = vmor %vm731, %vm732
    %v734 = vsel %vm733, %v726, %v730
    %v735 = vand.u32 2147483647, %v725
    %vm736 = vcmp.eq.f32.partialorder %v735, 8.507059e+37
    %v737 = vand.u32 %v725, 2147483648
    %v738 = vor.u32 1.1754944e-38, %v737
    %v739 = vsel %vm736, %v738, %v734
    %v740 = vmul.f32 1.0, %v739
    %v741 = vmul.f32 %v676, %v740
    %v742 = vmul.f32 %v677, %v740
    %v743 = vmul.f32 %v680, %v740
    %v744 = vmul.f32 %v681, %v740
    %v745 = vmul.f32 %v684, %v740
    %v746 = vmul.f32 %v685, %v740
    %v747 = vmul.f32 %v688, %v740
    %v748 = vmul.f32 %v689, %v740
    %v749 = vlaneseq
    %v750 = vshrl.u32 %v749, 7
    %s751 = smul.u32 0, 8
    %v752 = vstv %s751
    %v753 = vadd.s32 %v750, %v752
    %vm754 = vcmp.lt.s32.totalorder %v753, 2
    %v755 = vsel %vm754, 1, 0
    %v756 = vcvt.s32.f32 %v755
    %v757 = vmul.f32 %v741, %v99
    %v758 = vmul.f32 %v742, %v99
    %v759 = vmul.f32 %v743, %v102
    %v760 = vmul.f32 %v744, %v102
    %v761 = vadd.f32 %v757, %v759
    %v762 = vadd.f32 %v758, %v760
    %v763 = vmul.f32 %v745, %v107
    %v764 = vmul.f32 %v746, %v107
    %v765 = vadd.f32 %v761, %v763
    %v766 = vadd.f32 %v762, %v764
    %v767 = vmul.f32 %v747, %v112
    %v768 = vmul.f32 %v748, %v112
    %v769 = vadd.f32 %v765, %v767
    %v770 = vadd.f32 %v766, %v768
    %v771 = vmul.f32 %v769, 0.0019607844
    %v772 = vmul.f32 %v770, 0.0019607844
    %v773 = vadd.f32 %v118, %v771
    %v774 = vadd.f32 %v119, %v772
    %v775 = vmax.f32 %v773, 0.0
    %v776 = vmax.f32 %v774, 0.0
    %v777 = vmul.f32 %v773, %v205
    %v778 = vmul.f32 %v774, %v220
    %v779 = vsub.f32 %v775, %v777
    %v780 = vsub.f32 %v776, %v778
    %v781 = vand.u32 2147483647, %v773
    %v782 = vand.u32 2147483647, %v774
    %v783 = vsub.f32 0.0, %v781
    %v784 = vsub.f32 0.0, %v782
    %v785 = vmul.f32 %v783, 1.442695
    %v786 = vpow.pop %v785
    %v787 = vmul.f32 %v784, 1.442695
    %v788 = vpow.pop %v787
    %v789 = vadd.f32 %v786, 1.0
    %v790 = vlog2.pop %v789
    %v791 = vmul.f32 %v790, 0.6931472
    %v792 = vmul.f32 -0.5, %v786
    %v793 = vadd.f32 %v792, 1.0
    %v794 = vmul.f32 %v793, %v786
    %v795 = vand.u32 2147483647, %v786
    %vm796 = vcmp.lt.f32.partialorder %v795, 0.0004427343
    %v797 = vsel %vm796, %v794, %v791
    %v798 = vadd.f32 %v788, 1.0
    %v799 = vlog2.pop %v798
    %v800 = vmul.f32 %v799, 0.6931472
    %v801 = vmul.f32 -0.5, %v788
    %v802 = vadd.f32 %v801, 1.0
    %v803 = vmul.f32 %v802, %v788
    %v804 = vand.u32 2147483647, %v788
    %vm805 = vcmp.lt.f32.partialorder %v804, 0.0004427343
    %v806 = vsel %vm805, %v803, %v800
    %v807 = vadd.f32 %v779, %v797
    %v808 = vadd.f32 %v780, %v806
    %v809 = vadd.f32 %v807, %v808
    %810 = vadd.xlane.f32.xlu0 %v809
    %v811 = vpop.xlane.xlu0 %810
    %v812 = vmul.f32 %v811, %v756
    %vm813 = vcmask 7168
    %v814 = vsel %vm813, %v812, 0.0
    %815 = vadd.xlane.f32.xlu0 %v814
    %v816 = vpop.xlane.xlu0 %815
    %v817 = vrot.slane %v816, 4
    %v818 = vadd.f32 %v816, %v817
    %v819 = vrot.slane %v818, 2
    %v820 = vadd.f32 %v818, %v819
    %v821 = vrot.slane %v820, 1
    %v822 = vadd.f32 %v820, %v821
    %s823 = vtos %v822
    %s824 = sadd.f32 %s823, 0.0
    %v825 = vmul.f32 %v741, %v120
    %v826 = vmul.f32 %v742, %v120
    %v827 = vmul.f32 %v743, %v123
    %v828 = vmul.f32 %v744, %v123
    %v829 = vadd.f32 %v825, %v827
    %v830 = vadd.f32 %v826, %v828
    %v831 = vmul.f32 %v745, %v128
    %v832 = vmul.f32 %v746, %v128
    %v833 = vadd.f32 %v829, %v831
    %v834 = vadd.f32 %v830, %v832
    %v835 = vmul.f32 %v747, %v133
    %v836 = vmul.f32 %v748, %v133
    %v837 = vadd.f32 %v833, %v835
    %v838 = vadd.f32 %v834, %v836
    %v839 = vmul.f32 %v837, 0.0019607844
    %v840 = vmul.f32 %v838, 0.0019607844
    %v841 = vadd.f32 %v139, %v839
    %v842 = vadd.f32 %v140, %v840
    %v843 = vmax.f32 %v841, 0.0
    %v844 = vmax.f32 %v842, 0.0
    %v845 = vmul.f32 %v841, %v243
    %v846 = vmul.f32 %v842, %v258
    %v847 = vsub.f32 %v843, %v845
    %v848 = vsub.f32 %v844, %v846
    %v849 = vand.u32 2147483647, %v841
    %v850 = vand.u32 2147483647, %v842
    %v851 = vsub.f32 0.0, %v849
    %v852 = vsub.f32 0.0, %v850
    %v853 = vmul.f32 %v851, 1.442695
    %v854 = vpow.pop %v853
    %v855 = vmul.f32 %v852, 1.442695
    %v856 = vpow.pop %v855
    %v857 = vadd.f32 %v854, 1.0
    %v858 = vlog2.pop %v857
    %v859 = vmul.f32 %v858, 0.6931472
    %v860 = vmul.f32 -0.5, %v854
    %v861 = vadd.f32 %v860, 1.0
    %v862 = vmul.f32 %v861, %v854
    %v863 = vand.u32 2147483647, %v854
    %vm864 = vcmp.lt.f32.partialorder %v863, 0.0004427343
    %v865 = vsel %vm864, %v862, %v859
    %v866 = vadd.f32 %v856, 1.0
    %v867 = vlog2.pop %v866
    %v868 = vmul.f32 %v867, 0.6931472
    %v869 = vmul.f32 -0.5, %v856
    %v870 = vadd.f32 %v869, 1.0
    %v871 = vmul.f32 %v870, %v856
    %v872 = vand.u32 2147483647, %v856
    %vm873 = vcmp.lt.f32.partialorder %v872, 0.0004427343
    %v874 = vsel %vm873, %v871, %v868
    %v875 = vadd.f32 %v847, %v865
    %v876 = vadd.f32 %v848, %v874
    %v877 = vadd.f32 %v875, %v876
    %878 = vadd.xlane.f32.xlu0 %v877
    %v879 = vpop.xlane.xlu0 %878
    %v880 = vmul.f32 %v879, %v756
    %v881 = vsel %vm813, %v880, 0.0
    %882 = vadd.xlane.f32.xlu0 %v881
    %v883 = vpop.xlane.xlu0 %882
    %v884 = vrot.slane %v883, 4
    %v885 = vadd.f32 %v883, %v884
    %v886 = vrot.slane %v885, 2
    %v887 = vadd.f32 %v885, %v886
    %v888 = vrot.slane %v887, 1
    %v889 = vadd.f32 %v887, %v888
    %s890 = vtos %v889
    %s891 = sadd.f32 %s824, %s890
    %v892 = vmul.f32 %v741, %v141
    %v893 = vmul.f32 %v742, %v141
    %v894 = vmul.f32 %v743, %v144
    %v895 = vmul.f32 %v744, %v144
    %v896 = vadd.f32 %v892, %v894
    %v897 = vadd.f32 %v893, %v895
    %v898 = vmul.f32 %v745, %v149
    %v899 = vmul.f32 %v746, %v149
    %v900 = vadd.f32 %v896, %v898
    %v901 = vadd.f32 %v897, %v899
    %v902 = vmul.f32 %v747, %v154
    %v903 = vmul.f32 %v748, %v154
    %v904 = vadd.f32 %v900, %v902
    %v905 = vadd.f32 %v901, %v903
    %v906 = vmul.f32 %v904, 0.0019607844
    %v907 = vmul.f32 %v905, 0.0019607844
    %v908 = vadd.f32 %v160, %v906
    %v909 = vadd.f32 %v161, %v907
    %v910 = vmax.f32 %v908, 0.0
    %v911 = vmax.f32 %v909, 0.0
    %v912 = vmul.f32 %v908, %v281
    %v913 = vmul.f32 %v909, %v296
    %v914 = vsub.f32 %v910, %v912
    %v915 = vsub.f32 %v911, %v913
    %v916 = vand.u32 2147483647, %v908
    %v917 = vand.u32 2147483647, %v909
    %v918 = vsub.f32 0.0, %v916
    %v919 = vsub.f32 0.0, %v917
    %v920 = vmul.f32 %v918, 1.442695
    %v921 = vpow.pop %v920
    %v922 = vmul.f32 %v919, 1.442695
    %v923 = vpow.pop %v922
    %v924 = vadd.f32 %v921, 1.0
    %v925 = vlog2.pop %v924
    %v926 = vmul.f32 %v925, 0.6931472
    %v927 = vmul.f32 -0.5, %v921
    %v928 = vadd.f32 %v927, 1.0
    %v929 = vmul.f32 %v928, %v921
    %v930 = vand.u32 2147483647, %v921
    %vm931 = vcmp.lt.f32.partialorder %v930, 0.0004427343
    %v932 = vsel %vm931, %v929, %v926
    %v933 = vadd.f32 %v923, 1.0
    %v934 = vlog2.pop %v933
    %v935 = vmul.f32 %v934, 0.6931472
    %v936 = vmul.f32 -0.5, %v923
    %v937 = vadd.f32 %v936, 1.0
    %v938 = vmul.f32 %v937, %v923
    %v939 = vand.u32 2147483647, %v923
    %vm940 = vcmp.lt.f32.partialorder %v939, 0.0004427343
    %v941 = vsel %vm940, %v938, %v935
    %v942 = vadd.f32 %v914, %v932
    %v943 = vadd.f32 %v915, %v941
    %v944 = vadd.f32 %v942, %v943
    %945 = vadd.xlane.f32.xlu0 %v944
    %v946 = vpop.xlane.xlu0 %945
    %v947 = vmul.f32 %v946, %v756
    %v948 = vsel %vm813, %v947, 0.0
    %949 = vadd.xlane.f32.xlu0 %v948
    %v950 = vpop.xlane.xlu0 %949
    %v951 = vrot.slane %v950, 4
    %v952 = vadd.f32 %v950, %v951
    %v953 = vrot.slane %v952, 2
    %v954 = vadd.f32 %v952, %v953
    %v955 = vrot.slane %v954, 1
    %v956 = vadd.f32 %v954, %v955
    %s957 = vtos %v956
    %s958 = sadd.f32 %s891, %s957
    %v959 = vmul.f32 %v741, %v162
    %v960 = vmul.f32 %v742, %v162
    %v961 = vmul.f32 %v743, %v165
    %v962 = vmul.f32 %v744, %v165
    %v963 = vadd.f32 %v959, %v961
    %v964 = vadd.f32 %v960, %v962
    %v965 = vmul.f32 %v745, %v170
    %v966 = vmul.f32 %v746, %v170
    %v967 = vadd.f32 %v963, %v965
    %v968 = vadd.f32 %v964, %v966
    %v969 = vmul.f32 %v747, %v175
    %v970 = vmul.f32 %v748, %v175
    %v971 = vadd.f32 %v967, %v969
    %v972 = vadd.f32 %v968, %v970
    %v973 = vmul.f32 %v971, 0.0019607844
    %v974 = vmul.f32 %v972, 0.0019607844
    %v975 = vadd.f32 %v181, %v973
    %v976 = vadd.f32 %v182, %v974
    %v977 = vmax.f32 %v975, 0.0
    %v978 = vmax.f32 %v976, 0.0
    %v979 = vmul.f32 %v975, %v319
    %v980 = vmul.f32 %v976, %v334
    %v981 = vsub.f32 %v977, %v979
    %v982 = vsub.f32 %v978, %v980
    %v983 = vand.u32 2147483647, %v975
    %v984 = vand.u32 2147483647, %v976
    %v985 = vsub.f32 0.0, %v983
    %v986 = vsub.f32 0.0, %v984
    %v987 = vmul.f32 %v985, 1.442695
    %v988 = vpow.pop %v987
    %v989 = vmul.f32 %v986, 1.442695
    %v990 = vpow.pop %v989
    %v991 = vadd.f32 %v988, 1.0
    %v992 = vlog2.pop %v991
    %v993 = vmul.f32 %v992, 0.6931472
    %v994 = vmul.f32 -0.5, %v988
    %v995 = vadd.f32 %v994, 1.0
    %v996 = vmul.f32 %v995, %v988
    %v997 = vand.u32 2147483647, %v988
    %vm998 = vcmp.lt.f32.partialorder %v997, 0.0004427343
    %v999 = vsel %vm998, %v996, %v993
    %v1000 = vadd.f32 %v990, 1.0
    %v1001 = vlog2.pop %v1000
    %v1002 = vmul.f32 %v1001, 0.6931472
    %v1003 = vmul.f32 -0.5, %v990
    %v1004 = vadd.f32 %v1003, 1.0
    %v1005 = vmul.f32 %v1004, %v990
    %v1006 = vand.u32 2147483647, %v990
    %vm1007 = vcmp.lt.f32.partialorder %v1006, 0.0004427343
    %v1008 = vsel %vm1007, %v1005, %v1002
    %v1009 = vadd.f32 %v981, %v999
    %v1010 = vadd.f32 %v982, %v1008
    %v1011 = vadd.f32 %v1009, %v1010
    %1012 = vadd.xlane.f32.xlu0 %v1011
    %v1013 = vpop.xlane.xlu0 %1012
    %v1014 = vmul.f32 %v1013, %v756
    %v1015 = vsel %vm813, %v1014, 0.0
    %1016 = vadd.xlane.f32.xlu0 %v1015
    %v1017 = vpop.xlane.xlu0 %1016
    %v1018 = vrot.slane %v1017, 4
    %v1019 = vadd.f32 %v1017, %v1018
    %v1020 = vrot.slane %v1019, 2
    %v1021 = vadd.f32 %v1019, %v1020
    %v1022 = vrot.slane %v1021, 1
    %v1023 = vadd.f32 %v1021, %v1022
    %s1024 = vtos %v1023
    %s1025 = sadd.f32 %s958, %s1024
    %s1026 = smul.f32 %s1025, 0.00048828125
    %v1027 = vstv %s1026
    %1028 = vst [vmem:[#allocation11] sm:$0xff] %v1027
    // Predicated region
    $region34: #{tpu_custom_call.1} parent=1 // pred_check
      _
    $region35: #{tpu_custom_call.1} parent=1 // pred_check_branch
      %1030 = sbr.rel (0) target = $region37
    $region36: #{tpu_custom_call.1} parent=1 // pred_region
      %1032 = vsyncadd [#allocation4], 0
      %s1034 = sshll.u32 [#allocation11], 4
      %s1035 = int_to_ptr.vmem [resolvable:$true] %s1034
      %s1036 = sshll.u32 %s4, 4
      %s1037 = int_to_ptr.hbm [resolvable:$true] %s1036
      %1039 = dma.vmem_to_hbm [thread:$0]  %s1035, 128, %s1037, [#allocation4]
    $region37: #{tpu_custom_call.1} parent=1 // pred_fallthru
      _
    // Predicated region
    $region38: #{tpu_custom_call.1} parent=1 // pred_check
      _
    $region39: #{tpu_custom_call.1} parent=1 // pred_check_branch
      %1041 = sbr.rel (0) target = $region41
    $region40: #{tpu_custom_call.1} parent=1 // pred_region
      %1043 = dma.done [#allocation4], 128
    $region41: #{tpu_custom_call.1} parent=1 // pred_fallthru
      _
    %1044 = vsyncpa [#allocation3], 1
    %1045 = vsyncpa [#allocation8], 1
    %1046 = vsyncpa [#allocation4], 1
    %1047 = vsyncpa [#allocation5], 1
    %1048 = vsyncpa [#allocation6], 1

</llo_original>
